<compile_context>
chip_gen: v5e
topology: v5e:2x2
jax: 0.10.0
libtpu: 0.0.40
codegen_flags: <defaults>
</compile_context>

<pallas_src>
import math
from functools import partial

import jax
import jax.numpy as jnp
import numpy as np
from jax import lax
from jax.experimental import pallas as pl
from jax.experimental.pallas import tpu as pltpu

BN_EPS = 1e-5
LANE = 128
MAX_LANE_TILE = 512
VMEM_LIMIT_BYTES = 32 * 1024 * 1024
FILTERS = (16, 16, 16, 16)


def _round_up(x, m):
    return -(-x // m) * m


def _choose_tiling(length):
    """Pick (padded length, lane-tile) with tile a multiple of 128 dividing L_pad."""
    l_round = _round_up(max(length, 1), LANE)
    tl = min(l_round, MAX_LANE_TILE)
    l_pad = _round_up(l_round, tl)
    return l_pad, tl


def _cparams():
    return pltpu.CompilerParams(
        dimension_semantics=("parallel", "parallel"),
        vmem_limit_bytes=VMEM_LIMIT_BYTES,
    )


# ---------------------------------------------------------------------------
# Kernels
# ---------------------------------------------------------------------------

def _conv_stats_kernel(x_ref, w_ref, conv_ref, stats_ref, *, tl, l_valid):
    """Pass 1: fused 3-tap Conv1d (single MXU matmul) + per-tile BN partial stats.

    x_ref:     (3*Cin, TL)  tap-stacked input tile (row k*Cin+ci == x[ci, l+k-1])
    w_ref:     (Cout, 3*Cin)
    conv_ref:  (Cout, TL)   conv output tile (bias dropped -- cancels in BN)
    stats_ref: (Cout, 2)    [sum, sum of squares] over the valid columns of the tile
    """
    lt = pl.program_id(1)
    conv = jnp.dot(w_ref[...], x_ref[...], preferred_element_type=jnp.float32)
    conv_ref[...] = conv
    cout = conv.shape[0]
    col = lt * tl + lax.broadcasted_iota(jnp.int32, (cout, tl), 1)
    masked = jnp.where(col < l_valid, conv, 0.0)
    stats_ref[:, 0:1] = jnp.sum(masked, axis=1, keepdims=True)
    stats_ref[:, 1:2] = jnp.sum(masked * masked, axis=1, keepdims=True)


def _conv_bias_relu_kernel(x_ref, w_ref, b_ref, out_ref, *, tl, l_valid):
    """Final layer: fused 3-tap Conv1d + bias + ReLU (no BatchNorm)."""
    lt = pl.program_id(1)
    y = jnp.dot(w_ref[...], x_ref[...], preferred_element_type=jnp.float32)
    y = jnp.maximum(y + b_ref[...], 0.0)
    cout = y.shape[0]
    col = lt * tl + lax.broadcasted_iota(jnp.int32, (cout, tl), 1)
    out_ref[...] = jnp.where(col < l_valid, y, 0.0)


def _bn_act_kernel(conv_ref, scale_ref, shift_ref, out_ref, *, tl, l_valid, relu):
    """Pass 2: y = conv*scale + shift (folded BatchNorm), optional ReLU, pad mask."""
    lt = pl.program_id(1)
    y = conv_ref[...] * scale_ref[...] + shift_ref[...]
    if relu:
        y = jnp.maximum(y, 0.0)
    cout = y.shape[0]
    col = lt * tl + lax.broadcasted_iota(jnp.int32, (cout, tl), 1)
    out_ref[...] = jnp.where(col < l_valid, y, 0.0)


def _bn_add_relu_kernel(conv_ref, scale_ref, shift_ref, res_ref, out_ref, *, tl, l_valid):
    """Pass 2 for the residual branch: ReLU(BN(conv) + residual)."""
    lt = pl.program_id(1)
    y = conv_ref[...] * scale_ref[...] + shift_ref[...] + res_ref[...]
    y = jnp.maximum(y, 0.0)
    cout = y.shape[0]
    col = lt * tl + lax.broadcasted_iota(jnp.int32, (cout, tl), 1)
    out_ref[...] = jnp.where(col < l_valid, y, 0.0)


# ---------------------------------------------------------------------------
# Layer wrappers
# ---------------------------------------------------------------------------

def _stack_taps(x_act):
    """(N, C, L_pad) -> (N, 3*C, L_pad): row k*C+c at column l holds x[c, l+k-1]
    (zero outside [0, L)); activations are kept zero beyond the valid length."""
    l_pad = x_act.shape[2]
    xh = jnp.pad(x_act, ((0, 0), (0, 0), (1, 1)))
    return jnp.concatenate(
        [xh[:, :, 0:l_pad], xh[:, :, 1:l_pad + 1], xh[:, :, 2:l_pad + 2]], axis=1)


def _fold_weight(w):
    """PyTorch (Cout, Cin, 3) conv weight -> (Cout, 3*Cin) tap-major matrix."""
    cout, cin, k = w.shape
    return jnp.transpose(w, (0, 2, 1)).reshape(cout, k * cin).astype(jnp.float32)


def _conv_pass(x3, w2, l_valid, tl):
    n, c3, l_pad = x3.shape
    cout = w2.shape[0]
    n_lt = l_pad // tl
    kernel = partial(_conv_stats_kernel, tl=tl, l_valid=l_valid)
    conv, stats = pl.pallas_call(
        kernel,
        grid=(n, n_lt),
        in_specs=[
            pl.BlockSpec((None, c3, tl), lambda i, j: (i, 0, j)),
            pl.BlockSpec((cout, c3), lambda i, j: (0, 0)),
        ],
        out_specs=[
            pl.BlockSpec((None, cout, tl), lambda i, j: (i, 0, j)),
            pl.BlockSpec((None, None, cout, 2), lambda i, j: (i, j, 0, 0)),
        ],
        out_shape=[
            jax.ShapeDtypeStruct((n, cout, l_pad), jnp.float32),
            jax.ShapeDtypeStruct((n, n_lt, cout, 2), jnp.float32),
        ],
        compiler_params=_cparams(),
    )(x3, w2)
    return conv, stats


def _bn_scale_shift(stats, gamma, beta, count):
    """Reduce per-tile partial stats and fold BN into per-channel scale/shift."""
    s = jnp.sum(stats, axis=(0, 1))                       # (Cout, 2)
    mean = s[:, 0] / count
    var = jnp.maximum(s[:, 1] / count - mean * mean, 0.0)  # biased batch variance
    inv_std = lax.rsqrt(var + BN_EPS)
    scale = gamma * inv_std
    shift = beta - mean * scale
    return scale[:, None].astype(jnp.float32), shift[:, None].astype(jnp.float32)


def _bn_pass(conv, scale, shift, l_valid, tl, *, relu, residual=None):
    n, cout, l_pad = conv.shape
    n_lt = l_pad // tl
    tile_spec = pl.BlockSpec((None, cout, tl), lambda i, j: (i, 0, j))
    vec_spec = pl.BlockSpec((cout, 1), lambda i, j: (0, 0))
    if residual is None:
        kernel = partial(_bn_act_kernel, tl=tl, l_valid=l_valid, relu=relu)
        in_specs = [tile_spec, vec_spec, vec_spec]
        args = (conv, scale, shift)
    else:
        kernel = partial(_bn_add_relu_kernel, tl=tl, l_valid=l_valid)
        in_specs = [tile_spec, vec_spec, vec_spec, tile_spec]
        args = (conv, scale, shift, residual)
    return pl.pallas_call(
        kernel,
        grid=(n, n_lt),
        in_specs=in_specs,
        out_specs=pl.BlockSpec((None, cout, tl), lambda i, j: (i, 0, j)),
        out_shape=jax.ShapeDtypeStruct((n, cout, l_pad), jnp.float32),
        input_output_aliases={0: 0},   # normalize the conv buffer in place
        compiler_params=_cparams(),
    )(*args)


def _conv_bn_layer(x_act, w, gamma, beta, l_valid, tl, *, relu, residual=None):
    """Conv1d(k=3,p=1) -> BatchNorm1d(train) [-> +residual] -> ReLU (optional)."""
    n = x_act.shape[0]
    x3 = _stack_taps(x_act)
    w2 = _fold_weight(w)
    conv, stats = _conv_pass(x3, w2, l_valid, tl)
    scale, shift = _bn_scale_shift(stats, gamma, beta, n * l_valid)
    return _bn_pass(conv, scale, shift, l_valid, tl, relu=relu, residual=residual)


def _conv_relu_layer(x_act, w, b, l_valid, tl):
    """Final Conv1d(k=3,p=1) + bias + ReLU (no BatchNorm)."""
    n, cin, l_pad = x_act.shape
    cout = w.shape[0]
    x3 = _stack_taps(x_act)
    w2 = _fold_weight(w)
    n_lt = l_pad // tl
    kernel = partial(_conv_bias_relu_kernel, tl=tl, l_valid=l_valid)
    return pl.pallas_call(
        kernel,
        grid=(n, n_lt),
        in_specs=[
            pl.BlockSpec((None, 3 * cin, tl), lambda i, j: (i, 0, j)),
            pl.BlockSpec((cout, 3 * cin), lambda i, j: (0, 0)),
            pl.BlockSpec((cout, 1), lambda i, j: (0, 0)),
        ],
        out_specs=pl.BlockSpec((None, cout, tl), lambda i, j: (i, 0, j)),
        out_shape=jax.ShapeDtypeStruct((n, cout, l_pad), jnp.float32),
        compiler_params=_cparams(),
    )(x3, w2, b.reshape(cout, 1).astype(jnp.float32))


# ---------------------------------------------------------------------------
# Full decoder forward
# ---------------------------------------------------------------------------

def clfcrn_decoder_forward(params, x):
    """CLFCRN_Decoder forward (is_batchnorm=True).  x: (N, C_in, L) -> (N, C_out, L)."""
    n, c_in, l = x.shape
    l_pad, tl = _choose_tiling(l)
    x_act = jnp.pad(x.astype(jnp.float32), ((0, 0), (0, 0), (0, l_pad - l)))

    # modelConv1: Conv1d -> BN -> ReLU
    p = params["conv1"]
    h = _conv_bn_layer(x_act, p["w"], p["gamma"], p["beta"], l, tl, relu=True)

    # 3 x modelResBlock: ReLU(BN(conv2(ReLU(BN(conv1(h))))) + h)
    for rb in params["resblocks"]:
        h1 = _conv_bn_layer(h, rb["w1"], rb["g1"], rb["b1"], l, tl, relu=True)
        h = _conv_bn_layer(h1, rb["w2"], rb["g2"], rb["b2"], l, tl, relu=False,
                           residual=h)

    # Final Conv1d + ReLU
    p = params["final"]
    out = _conv_relu_layer(h, p["w"], p["b"], l, tl)
    return out[:, :, :l]


# ---------------------------------------------------------------------------
# Parameters and pure-JAX reference
# ---------------------------------------------------------------------------

def init_decoder_params(key, in_channels, out_channels):
    """Synthetic deterministic parameters for a freshly constructed module.

    Conv biases of the BN-wrapped convs are omitted: training-mode BatchNorm
    subtracts the batch mean, so any conv bias cancels exactly and the forward
    output is identical to the PyTorch module for arbitrary bias values.
    """
    def conv_w(k, cout, cin):
        scale = 1.0 / math.sqrt(3.0 * cin)
        return scale * jax.random.normal(k, (cout, cin, 3), dtype=jnp.float32)

    keys = jax.random.split(key, 12)
    params = {
        "conv1": {
            "w": conv_w(keys[0], FILTERS[0], in_channels),
            "gamma": jnp.ones((FILTERS[0],), jnp.float32),   # BN default weight
            "beta": jnp.zeros((FILTERS[0],), jnp.float32),   # BN default bias
        },
        "resblocks": [],
        "final": {
            "w": conv_w(keys[1], out_channels, FILTERS[3]),
            "b": 0.1 * jax.random.normal(keys[2], (out_channels,), dtype=jnp.float32),
        },
    }
    ki = 3
    for i in range(3):
        c_in, c_out = FILTERS[i], FILTERS[i + 1]
        params["resblocks"].append({
            "w1": conv_w(keys[ki], c_out, c_in),
            "g1": jnp.ones((c_out,), jnp.float32),
            "b1": jnp.zeros((c_out,), jnp.float32),
            "w2": conv_w(keys[ki + 1], c_out, c_out),
            "g2": jnp.ones((c_out,), jnp.float32),
            "b2": jnp.zeros((c_out,), jnp.float32),
        })
        ki += 2
    return params


def _ref_conv1d(x, w, b=None):
    n, cin, l = x.shape
    xp = jnp.pad(x, ((0, 0), (0, 0), (1, 1)))
    out = sum(jnp.einsum("oi,nil->nol", w[:, :, k], xp[:, :, k:k + l]) for k in range(3))
    if b is not None:
        out = out + b[None, :, None]
    return out


def _ref_bn(x, gamma, beta):
    mean = jnp.mean(x, axis=(0, 2), keepdims=True)
    var = jnp.mean((x - mean) ** 2, axis=(0, 2), keepdims=True)
    xn = (x - mean) * lax.rsqrt(var + BN_EPS)
    return xn * gamma[None, :, None] + beta[None, :, None]


def reference_forward(params, x):
    p = params["conv1"]
    h = jax.nn.relu(_ref_bn(_ref_conv1d(x, p["w"]), p["gamma"], p["beta"]))
    for rb in params["resblocks"]:
        h1 = jax.nn.relu(_ref_bn(_ref_conv1d(h, rb["w1"]), rb["g1"], rb["b1"]))
        h2 = _ref_bn(_ref_conv1d(h1, rb["w2"]), rb["g2"], rb["b2"])
        h = jax.nn.relu(h2 + h)
    p = params["final"]
    return jax.nn.relu(_ref_conv1d(h, p["w"], p["b"]))


if __name__ == "__main__":
    key = jax.random.PRNGKey(0)
    k_x, k_p = jax.random.split(key)

    # Small shapes consistent with the module: (batch, in_channels, length)
    N, C_IN, C_OUT, L = 2, 4, 4, 16
    x = jax.random.normal(k_x, (N, C_IN, L), dtype=jnp.float32)
    params = init_decoder_params(k_p, C_IN, C_OUT)

    fwd = jax.jit(clfcrn_decoder_forward)
    out = fwd(params, x)
    jax.block_until_ready(out)
    assert out.shape == (N, C_OUT, L)

    # Cross-check against a pure-JAX reference of the same module (train-mode BN).
    ref = reference_forward(params, x)
    np.testing.assert_allclose(np.asarray(out), np.asarray(ref), rtol=2e-3, atol=2e-3)

    print("KERNEL_OK")
</pallas_src>

<mosaic_0001>
module attributes {stable_mosaic.version = 11 : i64} {
  func.func @_conv_stats_kernel(%arg0: i32, %arg1: i32, %arg2: memref<1x12x128xf32, #tpu.memory_space<vmem>>, %arg3: memref<16x12xf32, #tpu.memory_space<vmem>>, %arg4: memref<1x16x128xf32, #tpu.memory_space<vmem>>, %arg5: memref<1x1x16x2xf32, #tpu.memory_space<vmem>>) attributes {dimension_semantics = [#tpu.dimension_semantics<parallel>, #tpu.dimension_semantics<parallel>], iteration_bounds = array<i64: 2, 1>, scalar_prefetch = 0 : i64, scratch_operands = 0 : i64, tpu.core_type = #tpu.core_type<tc>, window_params = [{transform_indices = @transform_0, window_bounds = array<i64: 1, 12, 128>}, {pipeline_mode = #tpu.pipeline_mode<synchronous>, transform_indices = @transform_1, window_bounds = array<i64: 16, 12>}, {transform_indices = @transform_2, window_bounds = array<i64: 1, 16, 128>}, {transform_indices = @transform_3, window_bounds = array<i64: 1, 1, 16, 2>}]} {
    %c0 = arith.constant 0 : index
    %c0_0 = arith.constant 0 : index
    %0 = vector.load %arg3[%c0, %c0_0] : memref<16x12xf32, #tpu.memory_space<vmem>>, vector<16x12xf32>
    %c0_1 = arith.constant 0 : index
    %c0_2 = arith.constant 0 : index
    %c0_3 = arith.constant 0 : index
    %1 = vector.load %arg2[%c0_1, %c0_2, %c0_3] : memref<1x12x128xf32, #tpu.memory_space<vmem>>, vector<1x12x128xf32>
    %2 = vector.shape_cast %1 : vector<1x12x128xf32> to vector<12x128xf32>
    %cst = arith.constant dense<0.000000e+00> : vector<16x128xf32>
    %3 = tpu.matmul %0, %2, %cst {dimension_numbers = #tpu.dot_dimension_numbers<[1], [0], [0], [1], [0, 0, 1, 1], [], []>} : vector<16x12xf32>, vector<12x128xf32>, vector<16x128xf32> -> vector<16x128xf32>
    %c0_4 = arith.constant 0 : index
    %c0_5 = arith.constant 0 : index
    %c0_6 = arith.constant 0 : index
    %4 = vector.load %arg4[%c0_4, %c0_5, %c0_6] : memref<1x16x128xf32, #tpu.memory_space<vmem>>, vector<1x16x128xf32>
    %5 = vector.shape_cast %4 : vector<1x16x128xf32> to vector<16x128xf32>
    %6 = vector.shape_cast %3 : vector<16x128xf32> to vector<1x16x128xf32>
    tpu.vector_store %arg4[%c0_4, %c0_5, %c0_6], %6 {strides = array<i32>} : memref<1x16x128xf32, #tpu.memory_space<vmem>>, vector<1x16x128xf32>,
    %c128_i32 = arith.constant 128 : i32
    %7 = arith.muli %arg1, %c128_i32 : i32
    %8 = tpu.iota {dimensions = array<i32: 1>} : vector<16x128xi32>
    %9 = vector.broadcast %7 : i32 to vector<16x128xi32>
    %10 = arith.addi %9, %8 : vector<16x128xi32>
    %c16_i32 = arith.constant 16 : i32
    %11 = vector.broadcast %c16_i32 : i32 to vector<16x128xi32>
    %12 = arith.cmpi slt, %10, %11 : vector<16x128xi32>
    %cst_7 = arith.constant 0.000000e+00 : f32
    %13 = vector.broadcast %cst_7 : f32 to vector<16x128xf32>
    %14 = arith.select %12, %3, %13 : vector<16x128xi1>, vector<16x128xf32>
    %cst_8 = arith.constant dense<0.000000e+00> : vector<16xf32>
    %15 = vector.multi_reduction <add>, %14, %cst_8 [1] : vector<16x128xf32> to vector<16xf32>
    %16 = vector.shape_cast %15 : vector<16xf32> to vector<16x1xf32>
    %c0_9 = arith.constant 0 : index
    %c0_10 = arith.constant 0 : index
    %c0_11 = arith.constant 0 : index
    %c0_12 = arith.constant 0 : index
    %17 = vector.load %arg5[%c0_9, %c0_10, %c0_11, %c0_12] : memref<1x1x16x2xf32, #tpu.memory_space<vmem>>, vector<1x1x16x1xf32>
    %18 = vector.shape_cast %17 : vector<1x1x16x1xf32> to vector<16x1xf32>
    %19 = vector.shape_cast %16 : vector<16x1xf32> to vector<1x1x16x1xf32>
    tpu.vector_store %arg5[%c0_9, %c0_10, %c0_11, %c0_12], %19 {strides = array<i32>} : memref<1x1x16x2xf32, #tpu.memory_space<vmem>>, vector<1x1x16x1xf32>,
    %20 = arith.mulf %14, %14 : vector<16x128xf32>
    %cst_13 = arith.constant dense<0.000000e+00> : vector<16xf32>
    %21 = vector.multi_reduction <add>, %20, %cst_13 [1] : vector<16x128xf32> to vector<16xf32>
    %22 = vector.shape_cast %21 : vector<16xf32> to vector<16x1xf32>
    %c0_14 = arith.constant 0 : index
    %c0_15 = arith.constant 0 : index
    %c0_16 = arith.constant 0 : index
    %c1 = arith.constant 1 : index
    %23 = vector.load %arg5[%c0_14, %c0_15, %c0_16, %c1] : memref<1x1x16x2xf32, #tpu.memory_space<vmem>>, vector<1x1x16x1xf32>
    %24 = vector.shape_cast %23 : vector<1x1x16x1xf32> to vector<16x1xf32>
    %25 = vector.shape_cast %22 : vector<16x1xf32> to vector<1x1x16x1xf32>
    tpu.vector_store %arg5[%c0_14, %c0_15, %c0_16, %c1], %25 {strides = array<i32>} : memref<1x1x16x2xf32, #tpu.memory_space<vmem>>, vector<1x1x16x1xf32>,
    return
  }
  func.func @transform_0(%arg0: i32, %arg1: i32) -> (i32, i32, i32) {
    %c0_i32 = arith.constant 0 : i32
    %c0_i32_0 = arith.constant 0 : i32
    return %arg0, %c0_i32, %arg1 : i32, i32, i32
  }
  func.func @transform_1(%arg0: i32, %arg1: i32) -> (i32, i32) {
    %c0_i32 = arith.constant 0 : i32
    %c0_i32_0 = arith.constant 0 : i32
    %c0_i32_1 = arith.constant 0 : i32
    return %c0_i32, %c0_i32_0 : i32, i32
  }
  func.func @transform_2(%arg0: i32, %arg1: i32) -> (i32, i32, i32) {
    %c0_i32 = arith.constant 0 : i32
    %c0_i32_0 = arith.constant 0 : i32
    return %arg0, %c0_i32, %arg1 : i32, i32, i32
  }
  func.func @transform_3(%arg0: i32, %arg1: i32) -> (i32, i32, i32, i32) {
    %c0_i32 = arith.constant 0 : i32
    %c0_i32_0 = arith.constant 0 : i32
    %c0_i32_1 = arith.constant 0 : i32
    return %arg0, %arg1, %c0_i32, %c0_i32_0 : i32, i32, i32, i32
  }
}

module attributes {stable_mosaic.version = 11 : i64} {
  func.func @_bn_act_kernel(%arg0: i32, %arg1: i32, %arg2: memref<1x16x128xf32, #tpu.memory_space<vmem>>, %arg3: memref<16x1xf32, #tpu.memory_space<vmem>>, %arg4: memref<16x1xf32, #tpu.memory_space<vmem>>, %arg5: memref<1x16x128xf32, #tpu.memory_space<vmem>>) attributes {dimension_semantics = [#tpu.dimension_semantics<parallel>, #tpu.dimension_semantics<parallel>], iteration_bounds = array<i64: 2, 1>, scalar_prefetch = 0 : i64, scratch_operands = 0 : i64, tpu.core_type = #tpu.core_type<tc>, window_params = [{transform_indices = @transform_0, window_bounds = array<i64: 1, 16, 128>}, {pipeline_mode = #tpu.pipeline_mode<synchronous>, transform_indices = @transform_1, window_bounds = array<i64: 16, 1>}, {pipeline_mode = #tpu.pipeline_mode<synchronous>, transform_indices = @transform_2, window_bounds = array<i64: 16, 1>}, {transform_indices = @transform_3, window_bounds = array<i64: 1, 16, 128>}]} {
    %c0 = arith.constant 0 : index
    %c0_0 = arith.constant 0 : index
    %c0_1 = arith.constant 0 : index
    %0 = vector.load %arg2[%c0, %c0_0, %c0_1] : memref<1x16x128xf32, #tpu.memory_space<vmem>>, vector<1x16x128xf32>
    %1 = vector.shape_cast %0 : vector<1x16x128xf32> to vector<16x128xf32>
    %c0_2 = arith.constant 0 : index
    %c0_3 = arith.constant 0 : index
    %2 = vector.load %arg3[%c0_2, %c0_3] : memref<16x1xf32, #tpu.memory_space<vmem>>, vector<16x1xf32>
    %3 = vector.broadcast %2 : vector<16x1xf32> to vector<16x128xf32>
    %4 = arith.mulf %1, %3 : vector<16x128xf32>
    %c0_4 = arith.constant 0 : index
    %c0_5 = arith.constant 0 : index
    %5 = vector.load %arg4[%c0_4, %c0_5] : memref<16x1xf32, #tpu.memory_space<vmem>>, vector<16x1xf32>
    %6 = vector.broadcast %5 : vector<16x1xf32> to vector<16x128xf32>
    %7 = arith.addf %4, %6 : vector<16x128xf32>
    %cst = arith.constant 0.000000e+00 : f32
    %8 = vector.broadcast %cst : f32 to vector<16x128xf32>
    %9 = arith.maximumf %7, %8 : vector<16x128xf32>
    %c128_i32 = arith.constant 128 : i32
    %10 = arith.muli %arg1, %c128_i32 : i32
    %11 = tpu.iota {dimensions = array<i32: 1>} : vector<16x128xi32>
    %12 = vector.broadcast %10 : i32 to vector<16x128xi32>
    %13 = arith.addi %12, %11 : vector<16x128xi32>
    %c16_i32 = arith.constant 16 : i32
    %14 = vector.broadcast %c16_i32 : i32 to vector<16x128xi32>
    %15 = arith.cmpi slt, %13, %14 : vector<16x128xi32>
    %cst_6 = arith.constant 0.000000e+00 : f32
    %16 = vector.broadcast %cst_6 : f32 to vector<16x128xf32>
    %17 = arith.select %15, %9, %16 : vector<16x128xi1>, vector<16x128xf32>
    %c0_7 = arith.constant 0 : index
    %c0_8 = arith.constant 0 : index
    %c0_9 = arith.constant 0 : index
    %18 = vector.load %arg5[%c0_7, %c0_8, %c0_9] : memref<1x16x128xf32, #tpu.memory_space<vmem>>, vector<1x16x128xf32>
    %19 = vector.shape_cast %18 : vector<1x16x128xf32> to vector<16x128xf32>
    %20 = vector.shape_cast %17 : vector<16x128xf32> to vector<1x16x128xf32>
    tpu.vector_store %arg5[%c0_7, %c0_8, %c0_9], %20 {strides = array<i32>} : memref<1x16x128xf32, #tpu.memory_space<vmem>>, vector<1x16x128xf32>,
    return
  }
  func.func @transform_0(%arg0: i32, %arg1: i32) -> (i32, i32, i32) {
    %c0_i32 = arith.constant 0 : i32
    %c0_i32_0 = arith.constant 0 : i32
    return %arg0, %c0_i32, %arg1 : i32, i32, i32
  }
  func.func @transform_1(%arg0: i32, %arg1: i32) -> (i32, i32) {
    %c0_i32 = arith.constant 0 : i32
    %c0_i32_0 = arith.constant 0 : i32
    %c0_i32_1 = arith.constant 0 : i32
    return %c0_i32, %c0_i32_0 : i32, i32
  }
  func.func @transform_2(%arg0: i32, %arg1: i32) -> (i32, i32) {
    %c0_i32 = arith.constant 0 : i32
    %c0_i32_0 = arith.constant 0 : i32
    %c0_i32_1 = arith.constant 0 : i32
    return %c0_i32, %c0_i32_0 : i32, i32
  }
  func.func @transform_3(%arg0: i32, %arg1: i32) -> (i32, i32, i32) {
    %c0_i32 = arith.constant 0 : i32
    %c0_i32_0 = arith.constant 0 : i32
    return %arg0, %c0_i32, %arg1 : i32, i32, i32
  }
}

module attributes {stable_mosaic.version = 11 : i64} {
  func.func @_bn_add_relu_kernel(%arg0: i32, %arg1: i32, %arg2: memref<1x16x128xf32, #tpu.memory_space<vmem>>, %arg3: memref<16x1xf32, #tpu.memory_space<vmem>>, %arg4: memref<16x1xf32, #tpu.memory_space<vmem>>, %arg5: memref<1x16x128xf32, #tpu.memory_space<vmem>>, %arg6: memref<1x16x128xf32, #tpu.memory_space<vmem>>) attributes {dimension_semantics = [#tpu.dimension_semantics<parallel>, #tpu.dimension_semantics<parallel>], iteration_bounds = array<i64: 2, 1>, scalar_prefetch = 0 : i64, scratch_operands = 0 : i64, tpu.core_type = #tpu.core_type<tc>, window_params = [{transform_indices = @transform_0, window_bounds = array<i64: 1, 16, 128>}, {pipeline_mode = #tpu.pipeline_mode<synchronous>, transform_indices = @transform_1, window_bounds = array<i64: 16, 1>}, {pipeline_mode = #tpu.pipeline_mode<synchronous>, transform_indices = @transform_2, window_bounds = array<i64: 16, 1>}, {transform_indices = @transform_3, window_bounds = array<i64: 1, 16, 128>}, {transform_indices = @transform_4, window_bounds = array<i64: 1, 16, 128>}]} {
    %c0 = arith.constant 0 : index
    %c0_0 = arith.constant 0 : index
    %c0_1 = arith.constant 0 : index
    %0 = vector.load %arg2[%c0, %c0_0, %c0_1] : memref<1x16x128xf32, #tpu.memory_space<vmem>>, vector<1x16x128xf32>
    %1 = vector.shape_cast %0 : vector<1x16x128xf32> to vector<16x128xf32>
    %c0_2 = arith.constant 0 : index
    %c0_3 = arith.constant 0 : index
    %2 = vector.load %arg3[%c0_2, %c0_3] : memref<16x1xf32, #tpu.memory_space<vmem>>, vector<16x1xf32>
    %3 = vector.broadcast %2 : vector<16x1xf32> to vector<16x128xf32>
    %4 = arith.mulf %1, %3 : vector<16x128xf32>
    %c0_4 = arith.constant 0 : index
    %c0_5 = arith.constant 0 : index
    %5 = vector.load %arg4[%c0_4, %c0_5] : memref<16x1xf32, #tpu.memory_space<vmem>>, vector<16x1xf32>
    %6 = vector.broadcast %5 : vector<16x1xf32> to vector<16x128xf32>
    %7 = arith.addf %4, %6 : vector<16x128xf32>
    %c0_6 = arith.constant 0 : index
    %c0_7 = arith.constant 0 : index
    %c0_8 = arith.constant 0 : index
    %8 = vector.load %arg5[%c0_6, %c0_7, %c0_8] : memref<1x16x128xf32, #tpu.memory_space<vmem>>, vector<1x16x128xf32>
    %9 = vector.shape_cast %8 : vector<1x16x128xf32> to vector<16x128xf32>
    %10 = arith.addf %7, %9 : vector<16x128xf32>
    %cst = arith.constant 0.000000e+00 : f32
    %11 = vector.broadcast %cst : f32 to vector<16x128xf32>
    %12 = arith.maximumf %10, %11 : vector<16x128xf32>
    %c128_i32 = arith.constant 128 : i32
    %13 = arith.muli %arg1, %c128_i32 : i32
    %14 = tpu.iota {dimensions = array<i32: 1>} : vector<16x128xi32>
    %15 = vector.broadcast %13 : i32 to vector<16x128xi32>
    %16 = arith.addi %15, %14 : vector<16x128xi32>
    %c16_i32 = arith.constant 16 : i32
    %17 = vector.broadcast %c16_i32 : i32 to vector<16x128xi32>
    %18 = arith.cmpi slt, %16, %17 : vector<16x128xi32>
    %cst_9 = arith.constant 0.000000e+00 : f32
    %19 = vector.broadcast %cst_9 : f32 to vector<16x128xf32>
    %20 = arith.select %18, %12, %19 : vector<16x128xi1>, vector<16x128xf32>
    %c0_10 = arith.constant 0 : index
    %c0_11 = arith.constant 0 : index
    %c0_12 = arith.constant 0 : index
    %21 = vector.load %arg6[%c0_10, %c0_11, %c0_12] : memref<1x16x128xf32, #tpu.memory_space<vmem>>, vector<1x16x128xf32>
    %22 = vector.shape_cast %21 : vector<1x16x128xf32> to vector<16x128xf32>
    %23 = vector.shape_cast %20 : vector<16x128xf32> to vector<1x16x128xf32>
    tpu.vector_store %arg6[%c0_10, %c0_11, %c0_12], %23 {strides = array<i32>} : memref<1x16x128xf32, #tpu.memory_space<vmem>>, vector<1x16x128xf32>,
    return
  }
  func.func @transform_0(%arg0: i32, %arg1: i32) -> (i32, i32, i32) {
    %c0_i32 = arith.constant 0 : i32
    %c0_i32_0 = arith.constant 0 : i32
    return %arg0, %c0_i32, %arg1 : i32, i32, i32
  }
  func.func @transform_1(%arg0: i32, %arg1: i32) -> (i32, i32) {
    %c0_i32 = arith.constant 0 : i32
    %c0_i32_0 = arith.constant 0 : i32
    %c0_i32_1 = arith.constant 0 : i32
    return %c0_i32, %c0_i32_0 : i32, i32
  }
  func.func @transform_2(%arg0: i32, %arg1: i32) -> (i32, i32) {
    %c0_i32 = arith.constant 0 : i32
    %c0_i32_0 = arith.constant 0 : i32
    %c0_i32_1 = arith.constant 0 : i32
    return %c0_i32, %c0_i32_0 : i32, i32
  }
  func.func @transform_3(%arg0: i32, %arg1: i32) -> (i32, i32, i32) {
    %c0_i32 = arith.constant 0 : i32
    %c0_i32_0 = arith.constant 0 : i32
    return %arg0, %c0_i32, %arg1 : i32, i32, i32
  }
  func.func @transform_4(%arg0: i32, %arg1: i32) -> (i32, i32, i32) {
    %c0_i32 = arith.constant 0 : i32
    %c0_i32_0 = arith.constant 0 : i32
    return %arg0, %c0_i32, %arg1 : i32, i32, i32
  }
}

module attributes {stable_mosaic.version = 11 : i64} {
  func.func @_conv_stats_kernel(%arg0: i32, %arg1: i32, %arg2: memref<1x48x128xf32, #tpu.memory_space<vmem>>, %arg3: memref<16x48xf32, #tpu.memory_space<vmem>>, %arg4: memref<1x16x128xf32, #tpu.memory_space<vmem>>, %arg5: memref<1x1x16x2xf32, #tpu.memory_space<vmem>>) attributes {dimension_semantics = [#tpu.dimension_semantics<parallel>, #tpu.dimension_semantics<parallel>], iteration_bounds = array<i64: 2, 1>, scalar_prefetch = 0 : i64, scratch_operands = 0 : i64, tpu.core_type = #tpu.core_type<tc>, window_params = [{transform_indices = @transform_0, window_bounds = array<i64: 1, 48, 128>}, {pipeline_mode = #tpu.pipeline_mode<synchronous>, transform_indices = @transform_1, window_bounds = array<i64: 16, 48>}, {transform_indices = @transform_2, window_bounds = array<i64: 1, 16, 128>}, {transform_indices = @transform_3, window_bounds = array<i64: 1, 1, 16, 2>}]} {
    %c0 = arith.constant 0 : index
    %c0_0 = arith.constant 0 : index
    %0 = vector.load %arg3[%c0, %c0_0] : memref<16x48xf32, #tpu.memory_space<vmem>>, vector<16x48xf32>
    %c0_1 = arith.constant 0 : index
    %c0_2 = arith.constant 0 : index
    %c0_3 = arith.constant 0 : index
    %1 = vector.load %arg2[%c0_1, %c0_2, %c0_3] : memref<1x48x128xf32, #tpu.memory_space<vmem>>, vector<1x48x128xf32>
    %2 = vector.shape_cast %1 : vector<1x48x128xf32> to vector<48x128xf32>
    %cst = arith.constant dense<0.000000e+00> : vector<16x128xf32>
    %3 = tpu.matmul %0, %2, %cst {dimension_numbers = #tpu.dot_dimension_numbers<[1], [0], [0], [1], [0, 0, 1, 1], [], []>} : vector<16x48xf32>, vector<48x128xf32>, vector<16x128xf32> -> vector<16x128xf32>
    %c0_4 = arith.constant 0 : index
    %c0_5 = arith.constant 0 : index
    %c0_6 = arith.constant 0 : index
    %4 = vector.load %arg4[%c0_4, %c0_5, %c0_6] : memref<1x16x128xf32, #tpu.memory_space<vmem>>, vector<1x16x128xf32>
    %5 = vector.shape_cast %4 : vector<1x16x128xf32> to vector<16x128xf32>
    %6 = vector.shape_cast %3 : vector<16x128xf32> to vector<1x16x128xf32>
    tpu.vector_store %arg4[%c0_4, %c0_5, %c0_6], %6 {strides = array<i32>} : memref<1x16x128xf32, #tpu.memory_space<vmem>>, vector<1x16x128xf32>,
    %c128_i32 = arith.constant 128 : i32
    %7 = arith.muli %arg1, %c128_i32 : i32
    %8 = tpu.iota {dimensions = array<i32: 1>} : vector<16x128xi32>
    %9 = vector.broadcast %7 : i32 to vector<16x128xi32>
    %10 = arith.addi %9, %8 : vector<16x128xi32>
    %c16_i32 = arith.constant 16 : i32
    %11 = vector.broadcast %c16_i32 : i32 to vector<16x128xi32>
    %12 = arith.cmpi slt, %10, %11 : vector<16x128xi32>
    %cst_7 = arith.constant 0.000000e+00 : f32
    %13 = vector.broadcast %cst_7 : f32 to vector<16x128xf32>
    %14 = arith.select %12, %3, %13 : vector<16x128xi1>, vector<16x128xf32>
    %cst_8 = arith.constant dense<0.000000e+00> : vector<16xf32>
    %15 = vector.multi_reduction <add>, %14, %cst_8 [1] : vector<16x128xf32> to vector<16xf32>
    %16 = vector.shape_cast %15 : vector<16xf32> to vector<16x1xf32>
    %c0_9 = arith.constant 0 : index
    %c0_10 = arith.constant 0 : index
    %c0_11 = arith.constant 0 : index
    %c0_12 = arith.constant 0 : index
    %17 = vector.load %arg5[%c0_9, %c0_10, %c0_11, %c0_12] : memref<1x1x16x2xf32, #tpu.memory_space<vmem>>, vector<1x1x16x1xf32>
    %18 = vector.shape_cast %17 : vector<1x1x16x1xf32> to vector<16x1xf32>
    %19 = vector.shape_cast %16 : vector<16x1xf32> to vector<1x1x16x1xf32>
    tpu.vector_store %arg5[%c0_9, %c0_10, %c0_11, %c0_12], %19 {strides = array<i32>} : memref<1x1x16x2xf32, #tpu.memory_space<vmem>>, vector<1x1x16x1xf32>,
    %20 = arith.mulf %14, %14 : vector<16x128xf32>
    %cst_13 = arith.constant dense<0.000000e+00> : vector<16xf32>
    %21 = vector.multi_reduction <add>, %20, %cst_13 [1] : vector<16x128xf32> to vector<16xf32>
    %22 = vector.shape_cast %21 : vector<16xf32> to vector<16x1xf32>
    %c0_14 = arith.constant 0 : index
    %c0_15 = arith.constant 0 : index
    %c0_16 = arith.constant 0 : index
    %c1 = arith.constant 1 : index
    %23 = vector.load %arg5[%c0_14, %c0_15, %c0_16, %c1] : memref<1x1x16x2xf32, #tpu.memory_space<vmem>>, vector<1x1x16x1xf32>
    %24 = vector.shape_cast %23 : vector<1x1x16x1xf32> to vector<16x1xf32>
    %25 = vector.shape_cast %22 : vector<16x1xf32> to vector<1x1x16x1xf32>
    tpu.vector_store %arg5[%c0_14, %c0_15, %c0_16, %c1], %25 {strides = array<i32>} : memref<1x1x16x2xf32, #tpu.memory_space<vmem>>, vector<1x1x16x1xf32>,
    return
  }
  func.func @transform_0(%arg0: i32, %arg1: i32) -> (i32, i32, i32) {
    %c0_i32 = arith.constant 0 : i32
    %c0_i32_0 = arith.constant 0 : i32
    return %arg0, %c0_i32, %arg1 : i32, i32, i32
  }
  func.func @transform_1(%arg0: i32, %arg1: i32) -> (i32, i32) {
    %c0_i32 = arith.constant 0 : i32
    %c0_i32_0 = arith.constant 0 : i32
    %c0_i32_1 = arith.constant 0 : i32
    return %c0_i32, %c0_i32_0 : i32, i32
  }
  func.func @transform_2(%arg0: i32, %arg1: i32) -> (i32, i32, i32) {
    %c0_i32 = arith.constant 0 : i32
    %c0_i32_0 = arith.constant 0 : i32
    return %arg0, %c0_i32, %arg1 : i32, i32, i32
  }
  func.func @transform_3(%arg0: i32, %arg1: i32) -> (i32, i32, i32, i32) {
    %c0_i32 = arith.constant 0 : i32
    %c0_i32_0 = arith.constant 0 : i32
    %c0_i32_1 = arith.constant 0 : i32
    return %arg0, %arg1, %c0_i32, %c0_i32_0 : i32, i32, i32, i32
  }
}

module attributes {stable_mosaic.version = 11 : i64} {
  func.func @_conv_bias_relu_kernel(%arg0: i32, %arg1: i32, %arg2: memref<1x48x128xf32, #tpu.memory_space<vmem>>, %arg3: memref<4x48xf32, #tpu.memory_space<vmem>>, %arg4: memref<4x1xf32, #tpu.memory_space<vmem>>, %arg5: memref<1x4x128xf32, #tpu.memory_space<vmem>>) attributes {dimension_semantics = [#tpu.dimension_semantics<parallel>, #tpu.dimension_semantics<parallel>], iteration_bounds = array<i64: 2, 1>, scalar_prefetch = 0 : i64, scratch_operands = 0 : i64, tpu.core_type = #tpu.core_type<tc>, window_params = [{transform_indices = @transform_0, window_bounds = array<i64: 1, 48, 128>}, {pipeline_mode = #tpu.pipeline_mode<synchronous>, transform_indices = @transform_1, window_bounds = array<i64: 4, 48>}, {pipeline_mode = #tpu.pipeline_mode<synchronous>, transform_indices = @transform_2, window_bounds = array<i64: 4, 1>}, {transform_indices = @transform_3, window_bounds = array<i64: 1, 4, 128>}]} {
    %c0 = arith.constant 0 : index
    %c0_0 = arith.constant 0 : index
    %0 = vector.load %arg3[%c0, %c0_0] : memref<4x48xf32, #tpu.memory_space<vmem>>, vector<4x48xf32>
    %c0_1 = arith.constant 0 : index
    %c0_2 = arith.constant 0 : index
    %c0_3 = arith.constant 0 : index
    %1 = vector.load %arg2[%c0_1, %c0_2, %c0_3] : memref<1x48x128xf32, #tpu.memory_space<vmem>>, vector<1x48x128xf32>
    %2 = vector.shape_cast %1 : vector<1x48x128xf32> to vector<48x128xf32>
    %cst = arith.constant dense<0.000000e+00> : vector<4x128xf32>
    %3 = tpu.matmul %0, %2, %cst {dimension_numbers = #tpu.dot_dimension_numbers<[1], [0], [0], [1], [0, 0, 1, 1], [], []>} : vector<4x48xf32>, vector<48x128xf32>, vector<4x128xf32> -> vector<4x128xf32>
    %c0_4 = arith.constant 0 : index
    %c0_5 = arith.constant 0 : index
    %4 = vector.load %arg4[%c0_4, %c0_5] : memref<4x1xf32, #tpu.memory_space<vmem>>, vector<4x1xf32>
    %5 = vector.broadcast %4 : vector<4x1xf32> to vector<4x128xf32>
    %6 = arith.addf %3, %5 : vector<4x128xf32>
    %cst_6 = arith.constant 0.000000e+00 : f32
    %7 = vector.broadcast %cst_6 : f32 to vector<4x128xf32>
    %8 = arith.maximumf %6, %7 : vector<4x128xf32>
    %c128_i32 = arith.constant 128 : i32
    %9 = arith.muli %arg1, %c128_i32 : i32
    %10 = tpu.iota {dimensions = array<i32: 1>} : vector<4x128xi32>
    %11 = vector.broadcast %9 : i32 to vector<4x128xi32>
    %12 = arith.addi %11, %10 : vector<4x128xi32>
    %c16_i32 = arith.constant 16 : i32
    %13 = vector.broadcast %c16_i32 : i32 to vector<4x128xi32>
    %14 = arith.cmpi slt, %12, %13 : vector<4x128xi32>
    %cst_7 = arith.constant 0.000000e+00 : f32
    %15 = vector.broadcast %cst_7 : f32 to vector<4x128xf32>
    %16 = arith.select %14, %8, %15 : vector<4x128xi1>, vector<4x128xf32>
    %c0_8 = arith.constant 0 : index
    %c0_9 = arith.constant 0 : index
    %c0_10 = arith.constant 0 : index
    %17 = vector.load %arg5[%c0_8, %c0_9, %c0_10] : memref<1x4x128xf32, #tpu.memory_space<vmem>>, vector<1x4x128xf32>
    %18 = vector.shape_cast %17 : vector<1x4x128xf32> to vector<4x128xf32>
    %19 = vector.shape_cast %16 : vector<4x128xf32> to vector<1x4x128xf32>
    tpu.vector_store %arg5[%c0_8, %c0_9, %c0_10], %19 {strides = array<i32>} : memref<1x4x128xf32, #tpu.memory_space<vmem>>, vector<1x4x128xf32>,
    return
  }
  func.func @transform_0(%arg0: i32, %arg1: i32) -> (i32, i32, i32) {
    %c0_i32 = arith.constant 0 : i32
    %c0_i32_0 = arith.constant 0 : i32
    return %arg0, %c0_i32, %arg1 : i32, i32, i32
  }
  func.func @transform_1(%arg0: i32, %arg1: i32) -> (i32, i32) {
    %c0_i32 = arith.constant 0 : i32
    %c0_i32_0 = arith.constant 0 : i32
    %c0_i32_1 = arith.constant 0 : i32
    return %c0_i32, %c0_i32_0 : i32, i32
  }
  func.func @transform_2(%arg0: i32, %arg1: i32) -> (i32, i32) {
    %c0_i32 = arith.constant 0 : i32
    %c0_i32_0 = arith.constant 0 : i32
    %c0_i32_1 = arith.constant 0 : i32
    return %c0_i32, %c0_i32_0 : i32, i32
  }
  func.func @transform_3(%arg0: i32, %arg1: i32) -> (i32, i32, i32) {
    %c0_i32 = arith.constant 0 : i32
    %c0_i32_0 = arith.constant 0 : i32
    return %arg0, %c0_i32, %arg1 : i32, i32, i32
  }
}

</mosaic_0001>

<llo_original>
// kernel: clfcrn_decoder_forward.15
$region0: #{clfcrn_decoder_forward.15}
  #allocation0 [shape = 'u32[]', space=smem, size = 0x4, offset = 0x4, fixed_abs, tag = 'smem constant byte address 0x4 - core index']
  #allocation1 [shape = 'u32[72,128]{1,0:T(1,128)}', space=vmem, size = 0x9000, scoped, tag = 'internal scratch']
  %s0 = inlined_call_operand.vmem [shape: f32[2,12,128], index: 0, kind: input, shape index: {}]
  %s1 = inlined_call_operand.vmem [shape: f32[16,12], index: 1, kind: input, shape index: {}]
  %s2 = inlined_call_operand.vmem [shape: f32[2,16,128], index: 2, kind: output, shape index: {0}]
  %s3 = inlined_call_operand.vmem [shape: f32[2,1,16,2], index: 3, kind: output, shape index: {1}]
  %4 = xla_tuple %s2, %s3
  %s5 = sld [smem:[#allocation0]]
  $region49: #{clfcrn_decoder_forward.15} parent=0
    _
  %s7 = ssub.s32 1, %s5
  %s8 = scalar_select 0, %s7, %s5
  loop: start=0, step=1, limit=4
  $region2: #{clfcrn_decoder_forward.15} parent=0 // loop_pre_header
    _
  $region3: #{clfcrn_decoder_forward.15} parent=0 // loop_header
    %s10 = sphi 0, %s14
    %p11 = scmp.ge.s32.totalorder %s10, 4
    %s17 = sphi 0, %s29
    %s18 = sphi 0, %s25
    %s19 = sphi 0, %s17
    %s20 = sphi 0, %s18
    %s21 = sphi 0, %s19
    %s22 = sphi 0, %s20
    %s34 = sphi 0, %s36
    %s37 = sphi 0, %s34
    %s38 = sphi 0, %s37
    %s54 = sphi 0, %s38
    %s58 = sphi 0, %s58
    %s60 = sphi 0, %s58
    %s61 = sphi 0, %s60
    %s75 = sphi 0, %s61
    %s83 = sphi 0, %s85
    %s86 = sphi 0, %s83
    %s87 = sphi 0, %s86
    %s103 = sphi 0, %s87
    %s111 = sphi 0, %s113
    %s114 = sphi 0, %s111
    %s115 = sphi 0, %s114
    %s131 = sphi 0, %s115
  $region4: #{clfcrn_decoder_forward.15} parent=0 // loop_header_branch
    %13 = sbr.rel (%p11) target = $region8
  $region5: #{clfcrn_decoder_forward.15} parent=0 // loop_body
    %s15 = ssub.s32 %s10, 1
    %s16 = ssub.s32 %s10, 2
    %s23 = sadd.s32 1, %s18
    %p24 = scmp.ge.s32.totalorder %s23, 1
    %s25 = scalar_select %p24, 0, %s23
    %s26 = sadd.s32 1, %s17
    %s27 = scalar_select %p24, %s26, %s17
    %p28 = scmp.ge.s32.totalorder %s27, 2
    %s29 = scalar_select %p28, 0, %s27
    %s30 = ssub.s32 %s17, %s29
    %s31 = ssub.s32 %s18, %s25
    %s32 = sor.u32 %s30, %s31
    %p33 = scmp.eq.s32.totalorder %s32, 0
    %s35 = sadd.s32 %s34, 1
    %s36 = scalar_select %p33, %s34, %s35
    %p39 = pneg %p33
    %p40 = scmp.eq.s32.totalorder %s10, 1
    %p41 = por %p39, %p40
    %p42 = scmp.ne.s32.totalorder %s34, %s37
    %p43 = scmp.eq.s32.totalorder %s10, 0
    %p44 = por %p42, %p43
    %p45 = scmp.ne.s32.totalorder %s34, %s37
    %p46 = scmp.eq.s32.totalorder %s15, 1
    %p47 = por %p45, %p46
    %p48 = scmp.ne.s32.totalorder %s37, %s38
    %p49 = scmp.eq.s32.totalorder %s15, 0
    %p50 = por %p48, %p49
    %p51 = scmp.ne.s32.totalorder %s37, %s38
    %p52 = scmp.eq.s32.totalorder %s16, 1
    %p53 = por %p51, %p52
    %p55 = scmp.ne.s32.totalorder %s38, %s54
    %p56 = scmp.eq.s32.totalorder %s16, 0
    %p57 = por %p55, %p56
    %s59 = sadd.s32 %s58, 1
    %p62 = scmp.eq.s32.totalorder %s10, 1
    %p63 = scmp.ne.s32.totalorder %s58, %s60
    %p64 = scmp.eq.s32.totalorder %s10, 0
    %p65 = por %p63, %p64
    %p66 = scmp.ne.s32.totalorder %s58, %s60
    %p67 = scmp.eq.s32.totalorder %s15, 1
    %p68 = por %p66, %p67
    %p69 = scmp.ne.s32.totalorder %s60, %s61
    %p70 = scmp.eq.s32.totalorder %s15, 0
    %p71 = por %p69, %p70
    %p72 = scmp.ne.s32.totalorder %s60, %s61
    %p73 = scmp.eq.s32.totalorder %s16, 1
    %p74 = por %p72, %p73
    %p76 = scmp.ne.s32.totalorder %s61, %s75
    %p77 = scmp.eq.s32.totalorder %s16, 0
    %p78 = por %p76, %p77
    %s79 = ssub.s32 %s17, %s29
    %s80 = ssub.s32 %s18, %s25
    %s81 = sor.u32 %s79, %s80
    %p82 = scmp.eq.s32.totalorder %s81, 0
    %s84 = sadd.s32 %s83, 1
    %s85 = scalar_select %p82, %s83, %s84
    %p88 = pneg %p82
    %p89 = scmp.eq.s32.totalorder %s10, 1
    %p90 = por %p88, %p89
    %p91 = scmp.ne.s32.totalorder %s83, %s86
    %p92 = scmp.eq.s32.totalorder %s10, 0
    %p93 = por %p91, %p92
    %p94 = scmp.ne.s32.totalorder %s83, %s86
    %p95 = scmp.eq.s32.totalorder %s15, 1
    %p96 = por %p94, %p95
    %p97 = scmp.ne.s32.totalorder %s86, %s87
    %p98 = scmp.eq.s32.totalorder %s15, 0
    %p99 = por %p97, %p98
    %p100 = scmp.ne.s32.totalorder %s86, %s87
    %p101 = scmp.eq.s32.totalorder %s16, 1
    %p102 = por %p100, %p101
    %p104 = scmp.ne.s32.totalorder %s87, %s103
    %p105 = scmp.eq.s32.totalorder %s16, 0
    %p106 = por %p104, %p105
    %s107 = ssub.s32 %s17, %s29
    %s108 = ssub.s32 %s18, %s25
    %s109 = sor.u32 %s107, %s108
    %p110 = scmp.eq.s32.totalorder %s109, 0
    %s112 = sadd.s32 %s111, 1
    %s113 = scalar_select %p110, %s111, %s112
    %p116 = pneg %p110
    %p117 = scmp.eq.s32.totalorder %s10, 1
    %p118 = por %p116, %p117
    %p119 = scmp.ne.s32.totalorder %s111, %s114
    %p120 = scmp.eq.s32.totalorder %s10, 0
    %p121 = por %p119, %p120
    %p122 = scmp.ne.s32.totalorder %s111, %s114
    %p123 = scmp.eq.s32.totalorder %s15, 1
    %p124 = por %p122, %p123
    %p125 = scmp.ne.s32.totalorder %s114, %s115
    %p126 = scmp.eq.s32.totalorder %s15, 0
    %p127 = por %p125, %p126
    %p128 = scmp.ne.s32.totalorder %s114, %s115
    %p129 = scmp.eq.s32.totalorder %s16, 1
    %p130 = por %p128, %p129
    %p132 = scmp.ne.s32.totalorder %s115, %s131
    %p133 = scmp.eq.s32.totalorder %s16, 0
    %p134 = por %p132, %p133
    %p135 = scmp.le.s32.totalorder 1, %s10
    %p136 = scmp.lt.s32.totalorder %s10, 3
    %p137 = pnand %p135, %p136
    %p138 = pneg %p137
    // Predicated region
    $region9: #{clfcrn_decoder_forward.15} parent=5 // pred_check
      _
    $region10: #{clfcrn_decoder_forward.15} parent=5 // pred_check_branch
      %140 = sbr.rel (%p137) target = $region12
    $region11: #{clfcrn_decoder_forward.15} parent=5 // pred_region
      %s141 = ssub.s32 %s10, 1
      // Predicated region
      $region13: #{clfcrn_decoder_forward.15} parent=11 // pred_check
        %p142 = pneg %p71
      $region14: #{clfcrn_decoder_forward.15} parent=11 // pred_check_branch
        %144 = sbr.rel (%p142) target = $region16
      $region15: #{clfcrn_decoder_forward.15} parent=11 // pred_region
        _
      $region16: #{clfcrn_decoder_forward.15} parent=11 // pred_fallthru
        _
    $region12: #{clfcrn_decoder_forward.15} parent=5 // pred_fallthru
      _
    %p145 = scmp.lt.s32.totalorder %s10, 2
    // Predicated region
    $region17: #{clfcrn_decoder_forward.15} parent=5 // pred_check
      %p146 = pneg %p145
    $region18: #{clfcrn_decoder_forward.15} parent=5 // pred_check_branch
      %148 = sbr.rel (%p146) target = $region20
    $region19: #{clfcrn_decoder_forward.15} parent=5 // pred_region
      // Predicated region
      $region21: #{clfcrn_decoder_forward.15} parent=19 // pred_check
        %p149 = pneg %p44
      $region22: #{clfcrn_decoder_forward.15} parent=19 // pred_check_branch
        %151 = sbr.rel (%p149) target = $region24
      $region23: #{clfcrn_decoder_forward.15} parent=19 // pred_region
        %p152 = scmp.lt.s32.totalorder %s17, 1
        %s153 = scalar_select %p152, %s17, 1
        %p154 = scmp.lt.s32.totalorder %s18, 0
        %s155 = scalar_select %p154, %s18, 0
        %s156 = smul.addr %s153, 2
        %s157 = sadd.s32 %s155, %s156
        %s158 = smul.addr %s157, 8
        %s159 = scalar_lea.vmem %s0, %s158
      $region24: #{clfcrn_decoder_forward.15} parent=19 // pred_fallthru
        _
    $region20: #{clfcrn_decoder_forward.15} parent=5 // pred_fallthru
      _
    %p160 = scmp.le.s32.totalorder 1, %s10
    %p161 = scmp.lt.s32.totalorder %s10, 3
    %p162 = pnand %p160, %p161
    %p163 = pneg %p162
    // Predicated region
    $region25: #{clfcrn_decoder_forward.15} parent=5 // pred_check
      _
    $region26: #{clfcrn_decoder_forward.15} parent=5 // pred_check_branch
      %165 = sbr.rel (%p162) target = $region28
    $region27: #{clfcrn_decoder_forward.15} parent=5 // pred_region
      %s166 = ssub.s32 %s10, 1
      %p167 = scmp.lt.s32.totalorder %s19, 1
      %s168 = scalar_select %p167, %s19, 1
      %p169 = scmp.lt.s32.totalorder %s20, 0
      %s170 = scalar_select %p169, %s20, 0
      %s171 = smul.addr %s168, 2
      %s172 = sadd.s32 %s170, %s171
      %s173 = smul.addr %s172, 8
      %s174 = scalar_lea.vmem %s0, %s173
      %p175 = pneg %p50
      %p176 = pneg %p47
      %p177 = pneg %p71
      %p178 = pneg %p68
      %p179 = pneg %p99
      %p180 = pneg %p96
      %p181 = scmp.lt.s32.totalorder %s19, 1
      %s182 = scalar_select %p181, %s19, 1
      %p183 = scmp.lt.s32.totalorder %s20, 0
      %s184 = scalar_select %p183, %s20, 0
      %s185 = smul.addr %s182, 2
      %s186 = sadd.s32 %s184, %s185
      %s187 = smul.addr %s186, 8
      %s188 = scalar_lea.vmem %s2, %s187
      %p189 = pneg %p127
      %p190 = pneg %p124
      %p191 = scmp.lt.s32.totalorder %s19, 1
      %s192 = scalar_select %p191, %s19, 1
      %p193 = scmp.lt.s32.totalorder %s20, 0
      %s194 = scalar_select %p193, %s20, 0
      %s195 = smul.addr %s194, 2
      %s196 = smul.addr %s192, 2
      %s197 = sadd.s32 %s195, %s196
      %s198 = smul.addr %s197, 8
      %s199 = scalar_lea.vmem %s3, %s198
      %p200 = scmp.lt.s32.totalorder %s19, 1
      %s201 = scalar_select %p200, %s19, 1
      %p202 = scmp.lt.s32.totalorder %s20, 0
      %s203 = scalar_select %p202, %s20, 0
      %s204 = smul.addr %s201, 2
      %s205 = sadd.s32 %s203, %s204
      %s206 = smul.addr %s205, 8
      %s207 = scalar_lea.vmem %s0, %s206
      %p208 = scmp.lt.s32.totalorder %s19, 1
      %s209 = scalar_select %p208, %s19, 1
      %p210 = scmp.lt.s32.totalorder %s20, 0
      %s211 = scalar_select %p210, %s20, 0
      %s212 = smul.addr %s209, 2
      %s213 = sadd.s32 %s211, %s212
      %s214 = smul.addr %s213, 8
      %s215 = scalar_lea.vmem %s2, %s214
      %p216 = scmp.lt.s32.totalorder %s19, 1
      %s217 = scalar_select %p216, %s19, 1
      %p218 = scmp.lt.s32.totalorder %s20, 0
      %s219 = scalar_select %p218, %s20, 0
      %s220 = smul.addr %s219, 2
      %s221 = smul.addr %s217, 2
      %s222 = sadd.s32 %s220, %s221
      %s223 = smul.addr %s222, 8
      %s224 = scalar_lea.vmem %s3, %s223
      %v225 = vld [vmem:[%s1] sm:$0xff]
      %v226 = vld [vmem:[%s1 + $0x8] sm:$0xff]
      %v227 = vld [vmem:[%s207] sm:$0xff]
      %v228 = vld [vmem:[%s207 + $0x8] sm:$0xf]
      %vm229 = vcmask 97280
      %v231 = vsel %vm229, %v225, 0
      %v234 = vsel %vm229, %v226, 0
      %vm236 = vcmask 1043456
      %v238 = vsel %vm236, %v228, 0
      %240 = vmatpush.msra.mxu0 0.0
      %241 = vmatpush.msra.mxu0 0.0
      %242 = vmatpush.msra.mxu0 0.0
      %243 = vmatpush.msra.mxu0 0.0
      %244 = vmatpush.msra.mxu0 0.0
      %245 = vmatpush.msra.mxu0 0.0
      %246 = vmatpush.msra.mxu0 0.0
      %247 = vmatpush.msra.mxu0 0.0
      %248 = vmatpush.msra.mxu0 0.0
      %249 = vmatpush.msra.mxu0 0.0
      %250 = vmatpush.msra.mxu0 0.0
      %251 = vmatpush.msra.mxu0 0.0
      %252 = vmatpush.msra.mxu0 0.0
      %253 = vmatpush.msra.mxu0 0.0
      %254 = vmatpush.msra.mxu0 %v238
      %255 = vmatpush.msra.mxu0 %v227
      %256 = vmatmul.f32.gmra.mxu0 %v231
      %v257 = vpop.f32.mrf.mxu0
      %v258 = vadd.f32 0.0, %v257
      %259 = vmatmul.f32.gmra.mxu0 %v234
      %v260 = vpop.f32.mrf.mxu0
      %v261 = vadd.f32 0.0, %v260
      %262 = vdwg.mxu0
      %263 = vst [vmem:[%s215] sm:$0xff] %v258
      %264 = vst [vmem:[%s215 + $0x8] sm:$0xff] %v261
      %s265 = smul.u32 %s20, 128
      %v266 = vlaneseq
      %v267 = vand.u32 %v266, 127
      %v268 = vstv %s265
      %v269 = vadd.s32 %v268, %v267
      %vm270 = vcmp.lt.s32.totalorder %v269, 16
      %v271 = vsel %vm270, %v258, 0.0
      %v272 = vsel %vm270, %v261, 0.0
      %273 = vadd.xlane.f32.xlu0 %v271
      %v274 = vpop.xlane.xlu0 %273
      %275 = vadd.xlane.f32.xlu0 %v272
      %v276 = vpop.xlane.xlu0 %275
      %vm277 = vcmask 7168
      %278 = vst.msk [vmem:[%s224] sm:$0xff] %vm277, %v274
      %279 = vst.msk [vmem:[%s224 + $0x8] sm:$0xff] %vm277, %v276
      %v280 = vmul.f32 %v271, %v271
      %v281 = vmul.f32 %v272, %v272
      %282 = vadd.xlane.f32.xlu0 %v280
      %v283 = vpop.xlane.xlu0 %282
      %284 = vadd.xlane.f32.xlu0 %v281
      %v285 = vpop.xlane.xlu0 %284
      %vm286 = vcmask 15368
      %287 = vst.msk [vmem:[%s224] sm:$0xff] %vm286, %v283
      %288 = vst.msk [vmem:[%s224 + $0x8] sm:$0xff] %vm286, %v285
      %p289 = scmp.lt.s32.totalorder %s19, 1
      %s290 = scalar_select %p289, %s19, 1
      %p291 = scmp.lt.s32.totalorder %s20, 0
      %s292 = scalar_select %p291, %s20, 0
      %s293 = smul.addr %s290, 2
      %s294 = sadd.s32 %s292, %s293
      %s295 = smul.addr %s294, 8
      %s296 = scalar_lea.vmem %s2, %s295
      %p297 = scmp.lt.s32.totalorder %s19, 1
      %s298 = scalar_select %p297, %s19, 1
      %p299 = scmp.lt.s32.totalorder %s20, 0
      %s300 = scalar_select %p299, %s20, 0
      %s301 = smul.addr %s300, 2
      %s302 = smul.addr %s298, 2
      %s303 = sadd.s32 %s301, %s302
      %s304 = smul.addr %s303, 8
      %s305 = scalar_lea.vmem %s3, %s304
      // Predicated region
      $region29: #{clfcrn_decoder_forward.15} parent=27 // pred_check
        %p306 = pneg %p96
      $region30: #{clfcrn_decoder_forward.15} parent=27 // pred_check_branch
        %308 = sbr.rel (%p306) target = $region32
      $region31: #{clfcrn_decoder_forward.15} parent=27 // pred_region
        _
      $region32: #{clfcrn_decoder_forward.15} parent=27 // pred_fallthru
        _
      // Predicated region
      $region33: #{clfcrn_decoder_forward.15} parent=27 // pred_check
        %p309 = pneg %p124
      $region34: #{clfcrn_decoder_forward.15} parent=27 // pred_check_branch
        %311 = sbr.rel (%p309) target = $region36
      $region35: #{clfcrn_decoder_forward.15} parent=27 // pred_region
        _
      $region36: #{clfcrn_decoder_forward.15} parent=27 // pred_fallthru
        _
    $region28: #{clfcrn_decoder_forward.15} parent=5 // pred_fallthru
      _
    %p312 = scmp.le.s32.totalorder 2, %s10
    // Predicated region
    $region37: #{clfcrn_decoder_forward.15} parent=5 // pred_check
      %p313 = pneg %p312
    $region38: #{clfcrn_decoder_forward.15} parent=5 // pred_check_branch
      %315 = sbr.rel (%p313) target = $region40
    $region39: #{clfcrn_decoder_forward.15} parent=5 // pred_region
      %s316 = ssub.s32 %s10, 2
      // Predicated region
      $region41: #{clfcrn_decoder_forward.15} parent=39 // pred_check
        %p317 = pneg %p102
      $region42: #{clfcrn_decoder_forward.15} parent=39 // pred_check_branch
        %319 = sbr.rel (%p317) target = $region44
      $region43: #{clfcrn_decoder_forward.15} parent=39 // pred_region
        %p320 = scmp.lt.s32.totalorder %s21, 1
        %s321 = scalar_select %p320, %s21, 1
        %p322 = scmp.lt.s32.totalorder %s22, 0
        %s323 = scalar_select %p322, %s22, 0
        %s324 = smul.addr %s321, 2
        %s325 = sadd.s32 %s323, %s324
        %s326 = smul.addr %s325, 8
        %s327 = scalar_lea.vmem %s2, %s326
      $region44: #{clfcrn_decoder_forward.15} parent=39 // pred_fallthru
        _
      // Predicated region
      $region45: #{clfcrn_decoder_forward.15} parent=39 // pred_check
        %p328 = pneg %p130
      $region46: #{clfcrn_decoder_forward.15} parent=39 // pred_check_branch
        %330 = sbr.rel (%p328) target = $region48
      $region47: #{clfcrn_decoder_forward.15} parent=39 // pred_region
        %p331 = scmp.lt.s32.totalorder %s21, 1
        %s332 = scalar_select %p331, %s21, 1
        %p333 = scmp.lt.s32.totalorder %s22, 0
        %s334 = scalar_select %p333, %s22, 0
        %s335 = smul.addr %s334, 2
        %s336 = smul.addr %s332, 2
        %s337 = sadd.s32 %s335, %s336
        %s338 = smul.addr %s337, 8
        %s339 = scalar_lea.vmem %s3, %s338
      $region48: #{clfcrn_decoder_forward.15} parent=39 // pred_fallthru
        _
    $region40: #{clfcrn_decoder_forward.15} parent=5 // pred_fallthru
      _
  $region6: #{clfcrn_decoder_forward.15} parent=0 // loop_footer
    %s14 = sadd.s32 1, %s10
  $region7: #{clfcrn_decoder_forward.15} parent=0 // loop_footer_branch
    %9 = sbr.rel target = $region3
  $region8: #{clfcrn_decoder_forward.15} parent=0 // loop_exit
    _

// kernel: clfcrn_decoder_forward.16
$region0: #{clfcrn_decoder_forward.16}
  #allocation0 [shape = 'u32[]', space=smem, size = 0x4, offset = 0x4, fixed_abs, tag = 'smem constant byte address 0x4 - core index']
  #allocation1 [shape = 'u32[72,128]{1,0:T(1,128)}', space=vmem, size = 0x9000, scoped, tag = 'internal scratch']
  %s0 = inlined_call_operand.vmem [shape: f32[2,16,128], index: 0, kind: input, shape index: {}, may-alias: {0,3}]
  %s1 = inlined_call_operand.vmem [shape: f32[16,1], index: 1, kind: input, shape index: {}]
  %s2 = inlined_call_operand.vmem [shape: f32[16,1], index: 2, kind: input, shape index: {}]
  %s3 = inlined_call_operand.vmem [shape: f32[2,16,128], index: 3, kind: output, shape index: {}, may-alias: {0,3}]
  %s4 = sld [smem:[#allocation0]]
  $region45: #{clfcrn_decoder_forward.16} parent=0
    _
  %s6 = ssub.s32 1, %s4
  %s7 = scalar_select 0, %s6, %s4
  loop: start=0, step=1, limit=4
  $region2: #{clfcrn_decoder_forward.16} parent=0 // loop_pre_header
    _
  $region3: #{clfcrn_decoder_forward.16} parent=0 // loop_header
    %s9 = sphi 0, %s13
    %p10 = scmp.ge.s32.totalorder %s9, 4
    %s16 = sphi 0, %s28
    %s17 = sphi 0, %s24
    %s18 = sphi 0, %s16
    %s19 = sphi 0, %s17
    %s20 = sphi 0, %s18
    %s21 = sphi 0, %s19
    %s33 = sphi 0, %s35
    %s36 = sphi 0, %s33
    %s37 = sphi 0, %s36
    %s53 = sphi 0, %s37
    %s57 = sphi 0, %s57
    %s59 = sphi 0, %s57
    %s60 = sphi 0, %s59
    %s74 = sphi 0, %s60
    %s78 = sphi 0, %s78
    %s80 = sphi 0, %s78
    %s81 = sphi 0, %s80
    %s95 = sphi 0, %s81
    %s103 = sphi 0, %s105
    %s106 = sphi 0, %s103
    %s107 = sphi 0, %s106
    %s123 = sphi 0, %s107
  $region4: #{clfcrn_decoder_forward.16} parent=0 // loop_header_branch
    %12 = sbr.rel (%p10) target = $region8
  $region5: #{clfcrn_decoder_forward.16} parent=0 // loop_body
    %s14 = ssub.s32 %s9, 1
    %s15 = ssub.s32 %s9, 2
    %s22 = sadd.s32 1, %s17
    %p23 = scmp.ge.s32.totalorder %s22, 1
    %s24 = scalar_select %p23, 0, %s22
    %s25 = sadd.s32 1, %s16
    %s26 = scalar_select %p23, %s25, %s16
    %p27 = scmp.ge.s32.totalorder %s26, 2
    %s28 = scalar_select %p27, 0, %s26
    %s29 = ssub.s32 %s16, %s28
    %s30 = ssub.s32 %s17, %s24
    %s31 = sor.u32 %s29, %s30
    %p32 = scmp.eq.s32.totalorder %s31, 0
    %s34 = sadd.s32 %s33, 1
    %s35 = scalar_select %p32, %s33, %s34
    %p38 = pneg %p32
    %p39 = scmp.eq.s32.totalorder %s9, 1
    %p40 = por %p38, %p39
    %p41 = scmp.ne.s32.totalorder %s33, %s36
    %p42 = scmp.eq.s32.totalorder %s9, 0
    %p43 = por %p41, %p42
    %p44 = scmp.ne.s32.totalorder %s33, %s36
    %p45 = scmp.eq.s32.totalorder %s14, 1
    %p46 = por %p44, %p45
    %p47 = scmp.ne.s32.totalorder %s36, %s37
    %p48 = scmp.eq.s32.totalorder %s14, 0
    %p49 = por %p47, %p48
    %p50 = scmp.ne.s32.totalorder %s36, %s37
    %p51 = scmp.eq.s32.totalorder %s15, 1
    %p52 = por %p50, %p51
    %p54 = scmp.ne.s32.totalorder %s37, %s53
    %p55 = scmp.eq.s32.totalorder %s15, 0
    %p56 = por %p54, %p55
    %s58 = sadd.s32 %s57, 1
    %p61 = scmp.eq.s32.totalorder %s9, 1
    %p62 = scmp.ne.s32.totalorder %s57, %s59
    %p63 = scmp.eq.s32.totalorder %s9, 0
    %p64 = por %p62, %p63
    %p65 = scmp.ne.s32.totalorder %s57, %s59
    %p66 = scmp.eq.s32.totalorder %s14, 1
    %p67 = por %p65, %p66
    %p68 = scmp.ne.s32.totalorder %s59, %s60
    %p69 = scmp.eq.s32.totalorder %s14, 0
    %p70 = por %p68, %p69
    %p71 = scmp.ne.s32.totalorder %s59, %s60
    %p72 = scmp.eq.s32.totalorder %s15, 1
    %p73 = por %p71, %p72
    %p75 = scmp.ne.s32.totalorder %s60, %s74
    %p76 = scmp.eq.s32.totalorder %s15, 0
    %p77 = por %p75, %p76
    %s79 = sadd.s32 %s78, 1
    %p82 = scmp.eq.s32.totalorder %s9, 1
    %p83 = scmp.ne.s32.totalorder %s78, %s80
    %p84 = scmp.eq.s32.totalorder %s9, 0
    %p85 = por %p83, %p84
    %p86 = scmp.ne.s32.totalorder %s78, %s80
    %p87 = scmp.eq.s32.totalorder %s14, 1
    %p88 = por %p86, %p87
    %p89 = scmp.ne.s32.totalorder %s80, %s81
    %p90 = scmp.eq.s32.totalorder %s14, 0
    %p91 = por %p89, %p90
    %p92 = scmp.ne.s32.totalorder %s80, %s81
    %p93 = scmp.eq.s32.totalorder %s15, 1
    %p94 = por %p92, %p93
    %p96 = scmp.ne.s32.totalorder %s81, %s95
    %p97 = scmp.eq.s32.totalorder %s15, 0
    %p98 = por %p96, %p97
    %s99 = ssub.s32 %s16, %s28
    %s100 = ssub.s32 %s17, %s24
    %s101 = sor.u32 %s99, %s100
    %p102 = scmp.eq.s32.totalorder %s101, 0
    %s104 = sadd.s32 %s103, 1
    %s105 = scalar_select %p102, %s103, %s104
    %p108 = pneg %p102
    %p109 = scmp.eq.s32.totalorder %s9, 1
    %p110 = por %p108, %p109
    %p111 = scmp.ne.s32.totalorder %s103, %s106
    %p112 = scmp.eq.s32.totalorder %s9, 0
    %p113 = por %p111, %p112
    %p114 = scmp.ne.s32.totalorder %s103, %s106
    %p115 = scmp.eq.s32.totalorder %s14, 1
    %p116 = por %p114, %p115
    %p117 = scmp.ne.s32.totalorder %s106, %s107
    %p118 = scmp.eq.s32.totalorder %s14, 0
    %p119 = por %p117, %p118
    %p120 = scmp.ne.s32.totalorder %s106, %s107
    %p121 = scmp.eq.s32.totalorder %s15, 1
    %p122 = por %p120, %p121
    %p124 = scmp.ne.s32.totalorder %s107, %s123
    %p125 = scmp.eq.s32.totalorder %s15, 0
    %p126 = por %p124, %p125
    %p127 = scmp.le.s32.totalorder 1, %s9
    %p128 = scmp.lt.s32.totalorder %s9, 3
    %p129 = pnand %p127, %p128
    %p130 = pneg %p129
    // Predicated region
    $region9: #{clfcrn_decoder_forward.16} parent=5 // pred_check
      _
    $region10: #{clfcrn_decoder_forward.16} parent=5 // pred_check_branch
      %132 = sbr.rel (%p129) target = $region12
    $region11: #{clfcrn_decoder_forward.16} parent=5 // pred_region
      %s133 = ssub.s32 %s9, 1
      // Predicated region
      $region13: #{clfcrn_decoder_forward.16} parent=11 // pred_check
        %p134 = pneg %p70
      $region14: #{clfcrn_decoder_forward.16} parent=11 // pred_check_branch
        %136 = sbr.rel (%p134) target = $region16
      $region15: #{clfcrn_decoder_forward.16} parent=11 // pred_region
        _
      $region16: #{clfcrn_decoder_forward.16} parent=11 // pred_fallthru
        _
      // Predicated region
      $region17: #{clfcrn_decoder_forward.16} parent=11 // pred_check
        %p137 = pneg %p91
      $region18: #{clfcrn_decoder_forward.16} parent=11 // pred_check_branch
        %139 = sbr.rel (%p137) target = $region20
      $region19: #{clfcrn_decoder_forward.16} parent=11 // pred_region
        _
      $region20: #{clfcrn_decoder_forward.16} parent=11 // pred_fallthru
        _
    $region12: #{clfcrn_decoder_forward.16} parent=5 // pred_fallthru
      _
    %p140 = scmp.lt.s32.totalorder %s9, 2
    // Predicated region
    $region21: #{clfcrn_decoder_forward.16} parent=5 // pred_check
      %p141 = pneg %p140
    $region22: #{clfcrn_decoder_forward.16} parent=5 // pred_check_branch
      %143 = sbr.rel (%p141) target = $region24
    $region23: #{clfcrn_decoder_forward.16} parent=5 // pred_region
      // Predicated region
      $region25: #{clfcrn_decoder_forward.16} parent=23 // pred_check
        %p144 = pneg %p43
      $region26: #{clfcrn_decoder_forward.16} parent=23 // pred_check_branch
        %146 = sbr.rel (%p144) target = $region28
      $region27: #{clfcrn_decoder_forward.16} parent=23 // pred_region
        %p147 = scmp.lt.s32.totalorder %s16, 1
        %s148 = scalar_select %p147, %s16, 1
        %p149 = scmp.lt.s32.totalorder %s17, 0
        %s150 = scalar_select %p149, %s17, 0
        %s151 = smul.addr %s148, 2
        %s152 = sadd.s32 %s150, %s151
        %s153 = smul.addr %s152, 8
        %s154 = scalar_lea.vmem %s0, %s153
      $region28: #{clfcrn_decoder_forward.16} parent=23 // pred_fallthru
        _
    $region24: #{clfcrn_decoder_forward.16} parent=5 // pred_fallthru
      _
    %p155 = scmp.le.s32.totalorder 1, %s9
    %p156 = scmp.lt.s32.totalorder %s9, 3
    %p157 = pnand %p155, %p156
    %p158 = pneg %p157
    // Predicated region
    $region29: #{clfcrn_decoder_forward.16} parent=5 // pred_check
      _
    $region30: #{clfcrn_decoder_forward.16} parent=5 // pred_check_branch
      %160 = sbr.rel (%p157) target = $region32
    $region31: #{clfcrn_decoder_forward.16} parent=5 // pred_region
      %s161 = ssub.s32 %s9, 1
      %p162 = scmp.lt.s32.totalorder %s18, 1
      %s163 = scalar_select %p162, %s18, 1
      %p164 = scmp.lt.s32.totalorder %s19, 0
      %s165 = scalar_select %p164, %s19, 0
      %s166 = smul.addr %s163, 2
      %s167 = sadd.s32 %s165, %s166
      %s168 = smul.addr %s167, 8
      %s169 = scalar_lea.vmem %s0, %s168
      %p170 = pneg %p49
      %p171 = pneg %p46
      %p172 = pneg %p70
      %p173 = pneg %p67
      %p174 = pneg %p91
      %p175 = pneg %p88
      %p176 = pneg %p119
      %p177 = pneg %p116
      %p178 = scmp.lt.s32.totalorder %s18, 1
      %s179 = scalar_select %p178, %s18, 1
      %p180 = scmp.lt.s32.totalorder %s19, 0
      %s181 = scalar_select %p180, %s19, 0
      %s182 = smul.addr %s179, 2
      %s183 = sadd.s32 %s181, %s182
      %s184 = smul.addr %s183, 8
      %s185 = scalar_lea.vmem %s3, %s184
      %p186 = scmp.lt.s32.totalorder %s18, 1
      %s187 = scalar_select %p186, %s18, 1
      %p188 = scmp.lt.s32.totalorder %s19, 0
      %s189 = scalar_select %p188, %s19, 0
      %s190 = smul.addr %s187, 2
      %s191 = sadd.s32 %s189, %s190
      %s192 = smul.addr %s191, 8
      %s193 = scalar_lea.vmem %s0, %s192
      %p194 = scmp.lt.s32.totalorder %s18, 1
      %s195 = scalar_select %p194, %s18, 1
      %p196 = scmp.lt.s32.totalorder %s19, 0
      %s197 = scalar_select %p196, %s19, 0
      %s198 = smul.addr %s195, 2
      %s199 = sadd.s32 %s197, %s198
      %s200 = smul.addr %s199, 8
      %s201 = scalar_lea.vmem %s3, %s200
      %v202 = vld [vmem:[%s193] sm:$0xff]
      %v203 = vld [vmem:[%s193 + $0x8] sm:$0xff]
      %v204 = vld [vmem:[%s1] sm:$0xff]
      %v205 = vld [vmem:[%s1 + $0x8] sm:$0xff]
      %207 = vset.pattern.permute.xlu0 0
      %208 = vperm.xlu0 %207, %v204
      %v209 = vpop.permute.xlu0 %208
      %212 = vset.pattern.permute.xlu0 0
      %213 = vperm.xlu0 %212, %v205
      %v214 = vpop.permute.xlu0 %213
      %v216 = vmul.f32 %v202, %v209
      %v217 = vmul.f32 %v203, %v214
      %v218 = vld [vmem:[%s2] sm:$0xff]
      %v219 = vld [vmem:[%s2 + $0x8] sm:$0xff]
      %221 = vset.pattern.permute.xlu0 0
      %222 = vperm.xlu0 %221, %v218
      %v223 = vpop.permute.xlu0 %222
      %226 = vset.pattern.permute.xlu0 0
      %227 = vperm.xlu0 %226, %v219
      %v228 = vpop.permute.xlu0 %227
      %v230 = vadd.f32 %v216, %v223
      %v231 = vadd.f32 %v217, %v228
      %v232 = vmax.f32 %v230, 0.0
      %v233 = vmax.f32 %v231, 0.0
      %s234 = smul.u32 %s19, 128
      %v235 = vlaneseq
      %v236 = vand.u32 %v235, 127
      %v237 = vstv %s234
      %v238 = vadd.s32 %v237, %v236
      %vm239 = vcmp.lt.s32.totalorder %v238, 16
      %v240 = vsel %vm239, %v232, 0.0
      %v241 = vsel %vm239, %v233, 0.0
      %242 = vst [vmem:[%s201] sm:$0xff] %v240
      %243 = vst [vmem:[%s201 + $0x8] sm:$0xff] %v241
      %p244 = scmp.lt.s32.totalorder %s18, 1
      %s245 = scalar_select %p244, %s18, 1
      %p246 = scmp.lt.s32.totalorder %s19, 0
      %s247 = scalar_select %p246, %s19, 0
      %s248 = smul.addr %s245, 2
      %s249 = sadd.s32 %s247, %s248
      %s250 = smul.addr %s249, 8
      %s251 = scalar_lea.vmem %s3, %s250
      // Predicated region
      $region33: #{clfcrn_decoder_forward.16} parent=31 // pred_check
        %p252 = pneg %p116
      $region34: #{clfcrn_decoder_forward.16} parent=31 // pred_check_branch
        %254 = sbr.rel (%p252) target = $region36
      $region35: #{clfcrn_decoder_forward.16} parent=31 // pred_region
        _
      $region36: #{clfcrn_decoder_forward.16} parent=31 // pred_fallthru
        _
    $region32: #{clfcrn_decoder_forward.16} parent=5 // pred_fallthru
      _
    %p255 = scmp.le.s32.totalorder 2, %s9
    // Predicated region
    $region37: #{clfcrn_decoder_forward.16} parent=5 // pred_check
      %p256 = pneg %p255
    $region38: #{clfcrn_decoder_forward.16} parent=5 // pred_check_branch
      %258 = sbr.rel (%p256) target = $region40
    $region39: #{clfcrn_decoder_forward.16} parent=5 // pred_region
      %s259 = ssub.s32 %s9, 2
      // Predicated region
      $region41: #{clfcrn_decoder_forward.16} parent=39 // pred_check
        %p260 = pneg %p122
      $region42: #{clfcrn_decoder_forward.16} parent=39 // pred_check_branch
        %262 = sbr.rel (%p260) target = $region44
      $region43: #{clfcrn_decoder_forward.16} parent=39 // pred_region
        %p263 = scmp.lt.s32.totalorder %s20, 1
        %s264 = scalar_select %p263, %s20, 1
        %p265 = scmp.lt.s32.totalorder %s21, 0
        %s266 = scalar_select %p265, %s21, 0
        %s267 = smul.addr %s264, 2
        %s268 = sadd.s32 %s266, %s267
        %s269 = smul.addr %s268, 8
        %s270 = scalar_lea.vmem %s3, %s269
      $region44: #{clfcrn_decoder_forward.16} parent=39 // pred_fallthru
        _
    $region40: #{clfcrn_decoder_forward.16} parent=5 // pred_fallthru
      _
  $region6: #{clfcrn_decoder_forward.16} parent=0 // loop_footer
    %s13 = sadd.s32 1, %s9
  $region7: #{clfcrn_decoder_forward.16} parent=0 // loop_footer_branch
    %8 = sbr.rel target = $region3
  $region8: #{clfcrn_decoder_forward.16} parent=0 // loop_exit
    _

// kernel: clfcrn_decoder_forward.20
$region0: #{clfcrn_decoder_forward.20}
  #allocation0 [shape = 'u32[]', space=smem, size = 0x4, offset = 0x4, fixed_abs, tag = 'smem constant byte address 0x4 - core index']
  #allocation1 [shape = 'u32[72,128]{1,0:T(1,128)}', space=vmem, size = 0x9000, scoped, tag = 'internal scratch']
  %s0 = inlined_call_operand.vmem [shape: f32[2,16,128], index: 0, kind: input, shape index: {}, may-alias: {0,4}]
  %s1 = inlined_call_operand.vmem [shape: f32[16,1], index: 1, kind: input, shape index: {}]
  %s2 = inlined_call_operand.vmem [shape: f32[16,1], index: 2, kind: input, shape index: {}]
  %s3 = inlined_call_operand.vmem [shape: f32[2,16,128], index: 3, kind: input, shape index: {}]
  %s4 = inlined_call_operand.vmem [shape: f32[2,16,128], index: 4, kind: output, shape index: {}, may-alias: {0,4}]
  %s5 = sld [smem:[#allocation0]]
  $region49: #{clfcrn_decoder_forward.20} parent=0
    _
  %s7 = ssub.s32 1, %s5
  %s8 = scalar_select 0, %s7, %s5
  loop: start=0, step=1, limit=4
  $region2: #{clfcrn_decoder_forward.20} parent=0 // loop_pre_header
    _
  $region3: #{clfcrn_decoder_forward.20} parent=0 // loop_header
    %s10 = sphi 0, %s14
    %p11 = scmp.ge.s32.totalorder %s10, 4
    %s17 = sphi 0, %s29
    %s18 = sphi 0, %s25
    %s19 = sphi 0, %s17
    %s20 = sphi 0, %s18
    %s21 = sphi 0, %s19
    %s22 = sphi 0, %s20
    %s34 = sphi 0, %s36
    %s37 = sphi 0, %s34
    %s38 = sphi 0, %s37
    %s54 = sphi 0, %s38
    %s58 = sphi 0, %s58
    %s60 = sphi 0, %s58
    %s61 = sphi 0, %s60
    %s75 = sphi 0, %s61
    %s79 = sphi 0, %s79
    %s81 = sphi 0, %s79
    %s82 = sphi 0, %s81
    %s96 = sphi 0, %s82
    %s104 = sphi 0, %s106
    %s107 = sphi 0, %s104
    %s108 = sphi 0, %s107
    %s124 = sphi 0, %s108
    %s132 = sphi 0, %s134
    %s135 = sphi 0, %s132
    %s136 = sphi 0, %s135
    %s152 = sphi 0, %s136
  $region4: #{clfcrn_decoder_forward.20} parent=0 // loop_header_branch
    %13 = sbr.rel (%p11) target = $region8
  $region5: #{clfcrn_decoder_forward.20} parent=0 // loop_body
    %s15 = ssub.s32 %s10, 1
    %s16 = ssub.s32 %s10, 2
    %s23 = sadd.s32 1, %s18
    %p24 = scmp.ge.s32.totalorder %s23, 1
    %s25 = scalar_select %p24, 0, %s23
    %s26 = sadd.s32 1, %s17
    %s27 = scalar_select %p24, %s26, %s17
    %p28 = scmp.ge.s32.totalorder %s27, 2
    %s29 = scalar_select %p28, 0, %s27
    %s30 = ssub.s32 %s17, %s29
    %s31 = ssub.s32 %s18, %s25
    %s32 = sor.u32 %s30, %s31
    %p33 = scmp.eq.s32.totalorder %s32, 0
    %s35 = sadd.s32 %s34, 1
    %s36 = scalar_select %p33, %s34, %s35
    %p39 = pneg %p33
    %p40 = scmp.eq.s32.totalorder %s10, 1
    %p41 = por %p39, %p40
    %p42 = scmp.ne.s32.totalorder %s34, %s37
    %p43 = scmp.eq.s32.totalorder %s10, 0
    %p44 = por %p42, %p43
    %p45 = scmp.ne.s32.totalorder %s34, %s37
    %p46 = scmp.eq.s32.totalorder %s15, 1
    %p47 = por %p45, %p46
    %p48 = scmp.ne.s32.totalorder %s37, %s38
    %p49 = scmp.eq.s32.totalorder %s15, 0
    %p50 = por %p48, %p49
    %p51 = scmp.ne.s32.totalorder %s37, %s38
    %p52 = scmp.eq.s32.totalorder %s16, 1
    %p53 = por %p51, %p52
    %p55 = scmp.ne.s32.totalorder %s38, %s54
    %p56 = scmp.eq.s32.totalorder %s16, 0
    %p57 = por %p55, %p56
    %s59 = sadd.s32 %s58, 1
    %p62 = scmp.eq.s32.totalorder %s10, 1
    %p63 = scmp.ne.s32.totalorder %s58, %s60
    %p64 = scmp.eq.s32.totalorder %s10, 0
    %p65 = por %p63, %p64
    %p66 = scmp.ne.s32.totalorder %s58, %s60
    %p67 = scmp.eq.s32.totalorder %s15, 1
    %p68 = por %p66, %p67
    %p69 = scmp.ne.s32.totalorder %s60, %s61
    %p70 = scmp.eq.s32.totalorder %s15, 0
    %p71 = por %p69, %p70
    %p72 = scmp.ne.s32.totalorder %s60, %s61
    %p73 = scmp.eq.s32.totalorder %s16, 1
    %p74 = por %p72, %p73
    %p76 = scmp.ne.s32.totalorder %s61, %s75
    %p77 = scmp.eq.s32.totalorder %s16, 0
    %p78 = por %p76, %p77
    %s80 = sadd.s32 %s79, 1
    %p83 = scmp.eq.s32.totalorder %s10, 1
    %p84 = scmp.ne.s32.totalorder %s79, %s81
    %p85 = scmp.eq.s32.totalorder %s10, 0
    %p86 = por %p84, %p85
    %p87 = scmp.ne.s32.totalorder %s79, %s81
    %p88 = scmp.eq.s32.totalorder %s15, 1
    %p89 = por %p87, %p88
    %p90 = scmp.ne.s32.totalorder %s81, %s82
    %p91 = scmp.eq.s32.totalorder %s15, 0
    %p92 = por %p90, %p91
    %p93 = scmp.ne.s32.totalorder %s81, %s82
    %p94 = scmp.eq.s32.totalorder %s16, 1
    %p95 = por %p93, %p94
    %p97 = scmp.ne.s32.totalorder %s82, %s96
    %p98 = scmp.eq.s32.totalorder %s16, 0
    %p99 = por %p97, %p98
    %s100 = ssub.s32 %s17, %s29
    %s101 = ssub.s32 %s18, %s25
    %s102 = sor.u32 %s100, %s101
    %p103 = scmp.eq.s32.totalorder %s102, 0
    %s105 = sadd.s32 %s104, 1
    %s106 = scalar_select %p103, %s104, %s105
    %p109 = pneg %p103
    %p110 = scmp.eq.s32.totalorder %s10, 1
    %p111 = por %p109, %p110
    %p112 = scmp.ne.s32.totalorder %s104, %s107
    %p113 = scmp.eq.s32.totalorder %s10, 0
    %p114 = por %p112, %p113
    %p115 = scmp.ne.s32.totalorder %s104, %s107
    %p116 = scmp.eq.s32.totalorder %s15, 1
    %p117 = por %p115, %p116
    %p118 = scmp.ne.s32.totalorder %s107, %s108
    %p119 = scmp.eq.s32.totalorder %s15, 0
    %p120 = por %p118, %p119
    %p121 = scmp.ne.s32.totalorder %s107, %s108
    %p122 = scmp.eq.s32.totalorder %s16, 1
    %p123 = por %p121, %p122
    %p125 = scmp.ne.s32.totalorder %s108, %s124
    %p126 = scmp.eq.s32.totalorder %s16, 0
    %p127 = por %p125, %p126
    %s128 = ssub.s32 %s17, %s29
    %s129 = ssub.s32 %s18, %s25
    %s130 = sor.u32 %s128, %s129
    %p131 = scmp.eq.s32.totalorder %s130, 0
    %s133 = sadd.s32 %s132, 1
    %s134 = scalar_select %p131, %s132, %s133
    %p137 = pneg %p131
    %p138 = scmp.eq.s32.totalorder %s10, 1
    %p139 = por %p137, %p138
    %p140 = scmp.ne.s32.totalorder %s132, %s135
    %p141 = scmp.eq.s32.totalorder %s10, 0
    %p142 = por %p140, %p141
    %p143 = scmp.ne.s32.totalorder %s132, %s135
    %p144 = scmp.eq.s32.totalorder %s15, 1
    %p145 = por %p143, %p144
    %p146 = scmp.ne.s32.totalorder %s135, %s136
    %p147 = scmp.eq.s32.totalorder %s15, 0
    %p148 = por %p146, %p147
    %p149 = scmp.ne.s32.totalorder %s135, %s136
    %p150 = scmp.eq.s32.totalorder %s16, 1
    %p151 = por %p149, %p150
    %p153 = scmp.ne.s32.totalorder %s136, %s152
    %p154 = scmp.eq.s32.totalorder %s16, 0
    %p155 = por %p153, %p154
    %p156 = scmp.le.s32.totalorder 1, %s10
    %p157 = scmp.lt.s32.totalorder %s10, 3
    %p158 = pnand %p156, %p157
    %p159 = pneg %p158
    // Predicated region
    $region9: #{clfcrn_decoder_forward.20} parent=5 // pred_check
      _
    $region10: #{clfcrn_decoder_forward.20} parent=5 // pred_check_branch
      %161 = sbr.rel (%p158) target = $region12
    $region11: #{clfcrn_decoder_forward.20} parent=5 // pred_region
      %s162 = ssub.s32 %s10, 1
      // Predicated region
      $region13: #{clfcrn_decoder_forward.20} parent=11 // pred_check
        %p163 = pneg %p71
      $region14: #{clfcrn_decoder_forward.20} parent=11 // pred_check_branch
        %165 = sbr.rel (%p163) target = $region16
      $region15: #{clfcrn_decoder_forward.20} parent=11 // pred_region
        _
      $region16: #{clfcrn_decoder_forward.20} parent=11 // pred_fallthru
        _
      // Predicated region
      $region17: #{clfcrn_decoder_forward.20} parent=11 // pred_check
        %p166 = pneg %p92
      $region18: #{clfcrn_decoder_forward.20} parent=11 // pred_check_branch
        %168 = sbr.rel (%p166) target = $region20
      $region19: #{clfcrn_decoder_forward.20} parent=11 // pred_region
        _
      $region20: #{clfcrn_decoder_forward.20} parent=11 // pred_fallthru
        _
    $region12: #{clfcrn_decoder_forward.20} parent=5 // pred_fallthru
      _
    %p169 = scmp.lt.s32.totalorder %s10, 2
    // Predicated region
    $region21: #{clfcrn_decoder_forward.20} parent=5 // pred_check
      %p170 = pneg %p169
    $region22: #{clfcrn_decoder_forward.20} parent=5 // pred_check_branch
      %172 = sbr.rel (%p170) target = $region24
    $region23: #{clfcrn_decoder_forward.20} parent=5 // pred_region
      // Predicated region
      $region25: #{clfcrn_decoder_forward.20} parent=23 // pred_check
        %p173 = pneg %p44
      $region26: #{clfcrn_decoder_forward.20} parent=23 // pred_check_branch
        %175 = sbr.rel (%p173) target = $region28
      $region27: #{clfcrn_decoder_forward.20} parent=23 // pred_region
        %p176 = scmp.lt.s32.totalorder %s17, 1
        %s177 = scalar_select %p176, %s17, 1
        %p178 = scmp.lt.s32.totalorder %s18, 0
        %s179 = scalar_select %p178, %s18, 0
        %s180 = smul.addr %s177, 2
        %s181 = sadd.s32 %s179, %s180
        %s182 = smul.addr %s181, 8
        %s183 = scalar_lea.vmem %s0, %s182
      $region28: #{clfcrn_decoder_forward.20} parent=23 // pred_fallthru
        _
      // Predicated region
      $region29: #{clfcrn_decoder_forward.20} parent=23 // pred_check
        %p184 = pneg %p114
      $region30: #{clfcrn_decoder_forward.20} parent=23 // pred_check_branch
        %186 = sbr.rel (%p184) target = $region32
      $region31: #{clfcrn_decoder_forward.20} parent=23 // pred_region
        %p187 = scmp.lt.s32.totalorder %s17, 1
        %s188 = scalar_select %p187, %s17, 1
        %p189 = scmp.lt.s32.totalorder %s18, 0
        %s190 = scalar_select %p189, %s18, 0
        %s191 = smul.addr %s188, 2
        %s192 = sadd.s32 %s190, %s191
        %s193 = smul.addr %s192, 8
        %s194 = scalar_lea.vmem %s3, %s193
      $region32: #{clfcrn_decoder_forward.20} parent=23 // pred_fallthru
        _
    $region24: #{clfcrn_decoder_forward.20} parent=5 // pred_fallthru
      _
    %p195 = scmp.le.s32.totalorder 1, %s10
    %p196 = scmp.lt.s32.totalorder %s10, 3
    %p197 = pnand %p195, %p196
    %p198 = pneg %p197
    // Predicated region
    $region33: #{clfcrn_decoder_forward.20} parent=5 // pred_check
      _
    $region34: #{clfcrn_decoder_forward.20} parent=5 // pred_check_branch
      %200 = sbr.rel (%p197) target = $region36
    $region35: #{clfcrn_decoder_forward.20} parent=5 // pred_region
      %s201 = ssub.s32 %s10, 1
      %p202 = scmp.lt.s32.totalorder %s19, 1
      %s203 = scalar_select %p202, %s19, 1
      %p204 = scmp.lt.s32.totalorder %s20, 0
      %s205 = scalar_select %p204, %s20, 0
      %s206 = smul.addr %s203, 2
      %s207 = sadd.s32 %s205, %s206
      %s208 = smul.addr %s207, 8
      %s209 = scalar_lea.vmem %s0, %s208
      %p210 = pneg %p50
      %p211 = pneg %p47
      %p212 = pneg %p71
      %p213 = pneg %p68
      %p214 = pneg %p92
      %p215 = pneg %p89
      %p216 = scmp.lt.s32.totalorder %s19, 1
      %s217 = scalar_select %p216, %s19, 1
      %p218 = scmp.lt.s32.totalorder %s20, 0
      %s219 = scalar_select %p218, %s20, 0
      %s220 = smul.addr %s217, 2
      %s221 = sadd.s32 %s219, %s220
      %s222 = smul.addr %s221, 8
      %s223 = scalar_lea.vmem %s3, %s222
      %p224 = pneg %p120
      %p225 = pneg %p117
      %p226 = pneg %p148
      %p227 = pneg %p145
      %p228 = scmp.lt.s32.totalorder %s19, 1
      %s229 = scalar_select %p228, %s19, 1
      %p230 = scmp.lt.s32.totalorder %s20, 0
      %s231 = scalar_select %p230, %s20, 0
      %s232 = smul.addr %s229, 2
      %s233 = sadd.s32 %s231, %s232
      %s234 = smul.addr %s233, 8
      %s235 = scalar_lea.vmem %s4, %s234
      %p236 = scmp.lt.s32.totalorder %s19, 1
      %s237 = scalar_select %p236, %s19, 1
      %p238 = scmp.lt.s32.totalorder %s20, 0
      %s239 = scalar_select %p238, %s20, 0
      %s240 = smul.addr %s237, 2
      %s241 = sadd.s32 %s239, %s240
      %s242 = smul.addr %s241, 8
      %s243 = scalar_lea.vmem %s0, %s242
      %p244 = scmp.lt.s32.totalorder %s19, 1
      %s245 = scalar_select %p244, %s19, 1
      %p246 = scmp.lt.s32.totalorder %s20, 0
      %s247 = scalar_select %p246, %s20, 0
      %s248 = smul.addr %s245, 2
      %s249 = sadd.s32 %s247, %s248
      %s250 = smul.addr %s249, 8
      %s251 = scalar_lea.vmem %s3, %s250
      %p252 = scmp.lt.s32.totalorder %s19, 1
      %s253 = scalar_select %p252, %s19, 1
      %p254 = scmp.lt.s32.totalorder %s20, 0
      %s255 = scalar_select %p254, %s20, 0
      %s256 = smul.addr %s253, 2
      %s257 = sadd.s32 %s255, %s256
      %s258 = smul.addr %s257, 8
      %s259 = scalar_lea.vmem %s4, %s258
      %v260 = vld [vmem:[%s243] sm:$0xff]
      %v261 = vld [vmem:[%s243 + $0x8] sm:$0xff]
      %v262 = vld [vmem:[%s1] sm:$0xff]
      %v263 = vld [vmem:[%s1 + $0x8] sm:$0xff]
      %265 = vset.pattern.permute.xlu0 0
      %266 = vperm.xlu0 %265, %v262
      %v267 = vpop.permute.xlu0 %266
      %270 = vset.pattern.permute.xlu0 0
      %271 = vperm.xlu0 %270, %v263
      %v272 = vpop.permute.xlu0 %271
      %v274 = vmul.f32 %v260, %v267
      %v275 = vmul.f32 %v261, %v272
      %v276 = vld [vmem:[%s2] sm:$0xff]
      %v277 = vld [vmem:[%s2 + $0x8] sm:$0xff]
      %279 = vset.pattern.permute.xlu0 0
      %280 = vperm.xlu0 %279, %v276
      %v281 = vpop.permute.xlu0 %280
      %284 = vset.pattern.permute.xlu0 0
      %285 = vperm.xlu0 %284, %v277
      %v286 = vpop.permute.xlu0 %285
      %v288 = vadd.f32 %v274, %v281
      %v289 = vadd.f32 %v275, %v286
      %v290 = vld [vmem:[%s251] sm:$0xff]
      %v291 = vld [vmem:[%s251 + $0x8] sm:$0xff]
      %v292 = vadd.f32 %v288, %v290
      %v293 = vadd.f32 %v289, %v291
      %v294 = vmax.f32 %v292, 0.0
      %v295 = vmax.f32 %v293, 0.0
      %s296 = smul.u32 %s20, 128
      %v297 = vlaneseq
      %v298 = vand.u32 %v297, 127
      %v299 = vstv %s296
      %v300 = vadd.s32 %v299, %v298
      %vm301 = vcmp.lt.s32.totalorder %v300, 16
      %v302 = vsel %vm301, %v294, 0.0
      %v303 = vsel %vm301, %v295, 0.0
      %304 = vst [vmem:[%s259] sm:$0xff] %v302
      %305 = vst [vmem:[%s259 + $0x8] sm:$0xff] %v303
      %p306 = scmp.lt.s32.totalorder %s19, 1
      %s307 = scalar_select %p306, %s19, 1
      %p308 = scmp.lt.s32.totalorder %s20, 0
      %s309 = scalar_select %p308, %s20, 0
      %s310 = smul.addr %s307, 2
      %s311 = sadd.s32 %s309, %s310
      %s312 = smul.addr %s311, 8
      %s313 = scalar_lea.vmem %s4, %s312
      // Predicated region
      $region37: #{clfcrn_decoder_forward.20} parent=35 // pred_check
        %p314 = pneg %p145
      $region38: #{clfcrn_decoder_forward.20} parent=35 // pred_check_branch
        %316 = sbr.rel (%p314) target = $region40
      $region39: #{clfcrn_decoder_forward.20} parent=35 // pred_region
        _
      $region40: #{clfcrn_decoder_forward.20} parent=35 // pred_fallthru
        _
    $region36: #{clfcrn_decoder_forward.20} parent=5 // pred_fallthru
      _
    %p317 = scmp.le.s32.totalorder 2, %s10
    // Predicated region
    $region41: #{clfcrn_decoder_forward.20} parent=5 // pred_check
      %p318 = pneg %p317
    $region42: #{clfcrn_decoder_forward.20} parent=5 // pred_check_branch
      %320 = sbr.rel (%p318) target = $region44
    $region43: #{clfcrn_decoder_forward.20} parent=5 // pred_region
      %s321 = ssub.s32 %s10, 2
      // Predicated region
      $region45: #{clfcrn_decoder_forward.20} parent=43 // pred_check
        %p322 = pneg %p151
      $region46: #{clfcrn_decoder_forward.20} parent=43 // pred_check_branch
        %324 = sbr.rel (%p322) target = $region48
      $region47: #{clfcrn_decoder_forward.20} parent=43 // pred_region
        %p325 = scmp.lt.s32.totalorder %s21, 1
        %s326 = scalar_select %p325, %s21, 1
        %p327 = scmp.lt.s32.totalorder %s22, 0
        %s328 = scalar_select %p327, %s22, 0
        %s329 = smul.addr %s326, 2
        %s330 = sadd.s32 %s328, %s329
        %s331 = smul.addr %s330, 8
        %s332 = scalar_lea.vmem %s4, %s331
      $region48: #{clfcrn_decoder_forward.20} parent=43 // pred_fallthru
        _
    $region44: #{clfcrn_decoder_forward.20} parent=5 // pred_fallthru
      _
  $region6: #{clfcrn_decoder_forward.20} parent=0 // loop_footer
    %s14 = sadd.s32 1, %s10
  $region7: #{clfcrn_decoder_forward.20} parent=0 // loop_footer_branch
    %9 = sbr.rel target = $region3
  $region8: #{clfcrn_decoder_forward.20} parent=0 // loop_exit
    _

// kernel: clfcrn_decoder_forward.17
$region0: #{clfcrn_decoder_forward.17}
  #allocation0 [shape = 'u32[]', space=smem, size = 0x4, offset = 0x4, fixed_abs, tag = 'smem constant byte address 0x4 - core index']
  #allocation1 [shape = 'u32[72,128]{1,0:T(1,128)}', space=vmem, size = 0x9000, scoped, tag = 'internal scratch']
  %s0 = inlined_call_operand.vmem [shape: f32[2,48,128], index: 0, kind: input, shape index: {}]
  %s1 = inlined_call_operand.vmem [shape: f32[16,48], index: 1, kind: input, shape index: {}]
  %s2 = inlined_call_operand.vmem [shape: f32[2,16,128], index: 2, kind: output, shape index: {0}]
  %s3 = inlined_call_operand.vmem [shape: f32[2,1,16,2], index: 3, kind: output, shape index: {1}]
  %4 = xla_tuple %s2, %s3
  %s5 = sld [smem:[#allocation0]]
  $region49: #{clfcrn_decoder_forward.17} parent=0
    _
  %s7 = ssub.s32 1, %s5
  %s8 = scalar_select 0, %s7, %s5
  loop: start=0, step=1, limit=4
  $region2: #{clfcrn_decoder_forward.17} parent=0 // loop_pre_header
    _
  $region3: #{clfcrn_decoder_forward.17} parent=0 // loop_header
    %s10 = sphi 0, %s14
    %p11 = scmp.ge.s32.totalorder %s10, 4
    %s17 = sphi 0, %s29
    %s18 = sphi 0, %s25
    %s19 = sphi 0, %s17
    %s20 = sphi 0, %s18
    %s21 = sphi 0, %s19
    %s22 = sphi 0, %s20
    %s34 = sphi 0, %s36
    %s37 = sphi 0, %s34
    %s38 = sphi 0, %s37
    %s54 = sphi 0, %s38
    %s58 = sphi 0, %s58
    %s60 = sphi 0, %s58
    %s61 = sphi 0, %s60
    %s75 = sphi 0, %s61
    %s83 = sphi 0, %s85
    %s86 = sphi 0, %s83
    %s87 = sphi 0, %s86
    %s103 = sphi 0, %s87
    %s111 = sphi 0, %s113
    %s114 = sphi 0, %s111
    %s115 = sphi 0, %s114
    %s131 = sphi 0, %s115
  $region4: #{clfcrn_decoder_forward.17} parent=0 // loop_header_branch
    %13 = sbr.rel (%p11) target = $region8
  $region5: #{clfcrn_decoder_forward.17} parent=0 // loop_body
    %s15 = ssub.s32 %s10, 1
    %s16 = ssub.s32 %s10, 2
    %s23 = sadd.s32 1, %s18
    %p24 = scmp.ge.s32.totalorder %s23, 1
    %s25 = scalar_select %p24, 0, %s23
    %s26 = sadd.s32 1, %s17
    %s27 = scalar_select %p24, %s26, %s17
    %p28 = scmp.ge.s32.totalorder %s27, 2
    %s29 = scalar_select %p28, 0, %s27
    %s30 = ssub.s32 %s17, %s29
    %s31 = ssub.s32 %s18, %s25
    %s32 = sor.u32 %s30, %s31
    %p33 = scmp.eq.s32.totalorder %s32, 0
    %s35 = sadd.s32 %s34, 1
    %s36 = scalar_select %p33, %s34, %s35
    %p39 = pneg %p33
    %p40 = scmp.eq.s32.totalorder %s10, 1
    %p41 = por %p39, %p40
    %p42 = scmp.ne.s32.totalorder %s34, %s37
    %p43 = scmp.eq.s32.totalorder %s10, 0
    %p44 = por %p42, %p43
    %p45 = scmp.ne.s32.totalorder %s34, %s37
    %p46 = scmp.eq.s32.totalorder %s15, 1
    %p47 = por %p45, %p46
    %p48 = scmp.ne.s32.totalorder %s37, %s38
    %p49 = scmp.eq.s32.totalorder %s15, 0
    %p50 = por %p48, %p49
    %p51 = scmp.ne.s32.totalorder %s37, %s38
    %p52 = scmp.eq.s32.totalorder %s16, 1
    %p53 = por %p51, %p52
    %p55 = scmp.ne.s32.totalorder %s38, %s54
    %p56 = scmp.eq.s32.totalorder %s16, 0
    %p57 = por %p55, %p56
    %s59 = sadd.s32 %s58, 1
    %p62 = scmp.eq.s32.totalorder %s10, 1
    %p63 = scmp.ne.s32.totalorder %s58, %s60
    %p64 = scmp.eq.s32.totalorder %s10, 0
    %p65 = por %p63, %p64
    %p66 = scmp.ne.s32.totalorder %s58, %s60
    %p67 = scmp.eq.s32.totalorder %s15, 1
    %p68 = por %p66, %p67
    %p69 = scmp.ne.s32.totalorder %s60, %s61
    %p70 = scmp.eq.s32.totalorder %s15, 0
    %p71 = por %p69, %p70
    %p72 = scmp.ne.s32.totalorder %s60, %s61
    %p73 = scmp.eq.s32.totalorder %s16, 1
    %p74 = por %p72, %p73
    %p76 = scmp.ne.s32.totalorder %s61, %s75
    %p77 = scmp.eq.s32.totalorder %s16, 0
    %p78 = por %p76, %p77
    %s79 = ssub.s32 %s17, %s29
    %s80 = ssub.s32 %s18, %s25
    %s81 = sor.u32 %s79, %s80
    %p82 = scmp.eq.s32.totalorder %s81, 0
    %s84 = sadd.s32 %s83, 1
    %s85 = scalar_select %p82, %s83, %s84
    %p88 = pneg %p82
    %p89 = scmp.eq.s32.totalorder %s10, 1
    %p90 = por %p88, %p89
    %p91 = scmp.ne.s32.totalorder %s83, %s86
    %p92 = scmp.eq.s32.totalorder %s10, 0
    %p93 = por %p91, %p92
    %p94 = scmp.ne.s32.totalorder %s83, %s86
    %p95 = scmp.eq.s32.totalorder %s15, 1
    %p96 = por %p94, %p95
    %p97 = scmp.ne.s32.totalorder %s86, %s87
    %p98 = scmp.eq.s32.totalorder %s15, 0
    %p99 = por %p97, %p98
    %p100 = scmp.ne.s32.totalorder %s86, %s87
    %p101 = scmp.eq.s32.totalorder %s16, 1
    %p102 = por %p100, %p101
    %p104 = scmp.ne.s32.totalorder %s87, %s103
    %p105 = scmp.eq.s32.totalorder %s16, 0
    %p106 = por %p104, %p105
    %s107 = ssub.s32 %s17, %s29
    %s108 = ssub.s32 %s18, %s25
    %s109 = sor.u32 %s107, %s108
    %p110 = scmp.eq.s32.totalorder %s109, 0
    %s112 = sadd.s32 %s111, 1
    %s113 = scalar_select %p110, %s111, %s112
    %p116 = pneg %p110
    %p117 = scmp.eq.s32.totalorder %s10, 1
    %p118 = por %p116, %p117
    %p119 = scmp.ne.s32.totalorder %s111, %s114
    %p120 = scmp.eq.s32.totalorder %s10, 0
    %p121 = por %p119, %p120
    %p122 = scmp.ne.s32.totalorder %s111, %s114
    %p123 = scmp.eq.s32.totalorder %s15, 1
    %p124 = por %p122, %p123
    %p125 = scmp.ne.s32.totalorder %s114, %s115
    %p126 = scmp.eq.s32.totalorder %s15, 0
    %p127 = por %p125, %p126
    %p128 = scmp.ne.s32.totalorder %s114, %s115
    %p129 = scmp.eq.s32.totalorder %s16, 1
    %p130 = por %p128, %p129
    %p132 = scmp.ne.s32.totalorder %s115, %s131
    %p133 = scmp.eq.s32.totalorder %s16, 0
    %p134 = por %p132, %p133
    %p135 = scmp.le.s32.totalorder 1, %s10
    %p136 = scmp.lt.s32.totalorder %s10, 3
    %p137 = pnand %p135, %p136
    %p138 = pneg %p137
    // Predicated region
    $region9: #{clfcrn_decoder_forward.17} parent=5 // pred_check
      _
    $region10: #{clfcrn_decoder_forward.17} parent=5 // pred_check_branch
      %140 = sbr.rel (%p137) target = $region12
    $region11: #{clfcrn_decoder_forward.17} parent=5 // pred_region
      %s141 = ssub.s32 %s10, 1
      // Predicated region
      $region13: #{clfcrn_decoder_forward.17} parent=11 // pred_check
        %p142 = pneg %p71
      $region14: #{clfcrn_decoder_forward.17} parent=11 // pred_check_branch
        %144 = sbr.rel (%p142) target = $region16
      $region15: #{clfcrn_decoder_forward.17} parent=11 // pred_region
        _
      $region16: #{clfcrn_decoder_forward.17} parent=11 // pred_fallthru
        _
    $region12: #{clfcrn_decoder_forward.17} parent=5 // pred_fallthru
      _
    %p145 = scmp.lt.s32.totalorder %s10, 2
    // Predicated region
    $region17: #{clfcrn_decoder_forward.17} parent=5 // pred_check
      %p146 = pneg %p145
    $region18: #{clfcrn_decoder_forward.17} parent=5 // pred_check_branch
      %148 = sbr.rel (%p146) target = $region20
    $region19: #{clfcrn_decoder_forward.17} parent=5 // pred_region
      // Predicated region
      $region21: #{clfcrn_decoder_forward.17} parent=19 // pred_check
        %p149 = pneg %p44
      $region22: #{clfcrn_decoder_forward.17} parent=19 // pred_check_branch
        %151 = sbr.rel (%p149) target = $region24
      $region23: #{clfcrn_decoder_forward.17} parent=19 // pred_region
        %p152 = scmp.lt.s32.totalorder %s17, 1
        %s153 = scalar_select %p152, %s17, 1
        %p154 = scmp.lt.s32.totalorder %s18, 0
        %s155 = scalar_select %p154, %s18, 0
        %s156 = smul.addr %s153, 6
        %s157 = sadd.s32 %s155, %s156
        %s158 = smul.addr %s157, 8
        %s159 = scalar_lea.vmem %s0, %s158
      $region24: #{clfcrn_decoder_forward.17} parent=19 // pred_fallthru
        _
    $region20: #{clfcrn_decoder_forward.17} parent=5 // pred_fallthru
      _
    %p160 = scmp.le.s32.totalorder 1, %s10
    %p161 = scmp.lt.s32.totalorder %s10, 3
    %p162 = pnand %p160, %p161
    %p163 = pneg %p162
    // Predicated region
    $region25: #{clfcrn_decoder_forward.17} parent=5 // pred_check
      _
    $region26: #{clfcrn_decoder_forward.17} parent=5 // pred_check_branch
      %165 = sbr.rel (%p162) target = $region28
    $region27: #{clfcrn_decoder_forward.17} parent=5 // pred_region
      %s166 = ssub.s32 %s10, 1
      %p167 = scmp.lt.s32.totalorder %s19, 1
      %s168 = scalar_select %p167, %s19, 1
      %p169 = scmp.lt.s32.totalorder %s20, 0
      %s170 = scalar_select %p169, %s20, 0
      %s171 = smul.addr %s168, 6
      %s172 = sadd.s32 %s170, %s171
      %s173 = smul.addr %s172, 8
      %s174 = scalar_lea.vmem %s0, %s173
      %p175 = pneg %p50
      %p176 = pneg %p47
      %p177 = pneg %p71
      %p178 = pneg %p68
      %p179 = pneg %p99
      %p180 = pneg %p96
      %p181 = scmp.lt.s32.totalorder %s19, 1
      %s182 = scalar_select %p181, %s19, 1
      %p183 = scmp.lt.s32.totalorder %s20, 0
      %s184 = scalar_select %p183, %s20, 0
      %s185 = smul.addr %s182, 2
      %s186 = sadd.s32 %s184, %s185
      %s187 = smul.addr %s186, 8
      %s188 = scalar_lea.vmem %s2, %s187
      %p189 = pneg %p127
      %p190 = pneg %p124
      %p191 = scmp.lt.s32.totalorder %s19, 1
      %s192 = scalar_select %p191, %s19, 1
      %p193 = scmp.lt.s32.totalorder %s20, 0
      %s194 = scalar_select %p193, %s20, 0
      %s195 = smul.addr %s194, 2
      %s196 = smul.addr %s192, 2
      %s197 = sadd.s32 %s195, %s196
      %s198 = smul.addr %s197, 8
      %s199 = scalar_lea.vmem %s3, %s198
      %p200 = scmp.lt.s32.totalorder %s19, 1
      %s201 = scalar_select %p200, %s19, 1
      %p202 = scmp.lt.s32.totalorder %s20, 0
      %s203 = scalar_select %p202, %s20, 0
      %s204 = smul.addr %s201, 6
      %s205 = sadd.s32 %s203, %s204
      %s206 = smul.addr %s205, 8
      %s207 = scalar_lea.vmem %s0, %s206
      %p208 = scmp.lt.s32.totalorder %s19, 1
      %s209 = scalar_select %p208, %s19, 1
      %p210 = scmp.lt.s32.totalorder %s20, 0
      %s211 = scalar_select %p210, %s20, 0
      %s212 = smul.addr %s209, 2
      %s213 = sadd.s32 %s211, %s212
      %s214 = smul.addr %s213, 8
      %s215 = scalar_lea.vmem %s2, %s214
      %p216 = scmp.lt.s32.totalorder %s19, 1
      %s217 = scalar_select %p216, %s19, 1
      %p218 = scmp.lt.s32.totalorder %s20, 0
      %s219 = scalar_select %p218, %s20, 0
      %s220 = smul.addr %s219, 2
      %s221 = smul.addr %s217, 2
      %s222 = sadd.s32 %s220, %s221
      %s223 = smul.addr %s222, 8
      %s224 = scalar_lea.vmem %s3, %s223
      %v225 = vld [vmem:[%s1] sm:$0xff]
      %v226 = vld [vmem:[%s1 + $0x8] sm:$0xff]
      %v227 = vld [vmem:[%s207] sm:$0xff]
      %v228 = vld [vmem:[%s207 + $0x8] sm:$0xff]
      %v229 = vld [vmem:[%s207 + $0x10] sm:$0xff]
      %v230 = vld [vmem:[%s207 + $0x18] sm:$0xff]
      %v231 = vld [vmem:[%s207 + $0x20] sm:$0xff]
      %v232 = vld [vmem:[%s207 + $0x28] sm:$0xff]
      %vm233 = vcmask 392192
      %v235 = vsel %vm233, %v225, 0
      %v238 = vsel %vm233, %v226, 0
      %240 = vmatpush.msra.mxu0 0.0
      %241 = vmatpush.msra.mxu0 0.0
      %242 = vmatpush.msra.mxu0 0.0
      %243 = vmatpush.msra.mxu0 0.0
      %244 = vmatpush.msra.mxu0 0.0
      %245 = vmatpush.msra.mxu0 0.0
      %246 = vmatpush.msra.mxu0 0.0
      %247 = vmatpush.msra.mxu0 0.0
      %248 = vmatpush.msra.mxu0 0.0
      %249 = vmatpush.msra.mxu0 0.0
      %250 = vmatpush.msra.mxu0 %v232
      %251 = vmatpush.msra.mxu0 %v231
      %252 = vmatpush.msra.mxu0 %v230
      %253 = vmatpush.msra.mxu0 %v229
      %254 = vmatpush.msra.mxu0 %v228
      %255 = vmatpush.msra.mxu0 %v227
      %256 = vmatmul.f32.gmra.mxu0 %v235
      %v257 = vpop.f32.mrf.mxu0
      %v258 = vadd.f32 0.0, %v257
      %259 = vmatmul.f32.gmra.mxu0 %v238
      %v260 = vpop.f32.mrf.mxu0
      %v261 = vadd.f32 0.0, %v260
      %262 = vdwg.mxu0
      %263 = vst [vmem:[%s215] sm:$0xff] %v258
      %264 = vst [vmem:[%s215 + $0x8] sm:$0xff] %v261
      %s265 = smul.u32 %s20, 128
      %v266 = vlaneseq
      %v267 = vand.u32 %v266, 127
      %v268 = vstv %s265
      %v269 = vadd.s32 %v268, %v267
      %vm270 = vcmp.lt.s32.totalorder %v269, 16
      %v271 = vsel %vm270, %v258, 0.0
      %v272 = vsel %vm270, %v261, 0.0
      %273 = vadd.xlane.f32.xlu0 %v271
      %v274 = vpop.xlane.xlu0 %273
      %275 = vadd.xlane.f32.xlu0 %v272
      %v276 = vpop.xlane.xlu0 %275
      %vm277 = vcmask 7168
      %278 = vst.msk [vmem:[%s224] sm:$0xff] %vm277, %v274
      %279 = vst.msk [vmem:[%s224 + $0x8] sm:$0xff] %vm277, %v276
      %v280 = vmul.f32 %v271, %v271
      %v281 = vmul.f32 %v272, %v272
      %282 = vadd.xlane.f32.xlu0 %v280
      %v283 = vpop.xlane.xlu0 %282
      %284 = vadd.xlane.f32.xlu0 %v281
      %v285 = vpop.xlane.xlu0 %284
      %vm286 = vcmask 15368
      %287 = vst.msk [vmem:[%s224] sm:$0xff] %vm286, %v283
      %288 = vst.msk [vmem:[%s224 + $0x8] sm:$0xff] %vm286, %v285
      %p289 = scmp.lt.s32.totalorder %s19, 1
      %s290 = scalar_select %p289, %s19, 1
      %p291 = scmp.lt.s32.totalorder %s20, 0
      %s292 = scalar_select %p291, %s20, 0
      %s293 = smul.addr %s290, 2
      %s294 = sadd.s32 %s292, %s293
      %s295 = smul.addr %s294, 8
      %s296 = scalar_lea.vmem %s2, %s295
      %p297 = scmp.lt.s32.totalorder %s19, 1
      %s298 = scalar_select %p297, %s19, 1
      %p299 = scmp.lt.s32.totalorder %s20, 0
      %s300 = scalar_select %p299, %s20, 0
      %s301 = smul.addr %s300, 2
      %s302 = smul.addr %s298, 2
      %s303 = sadd.s32 %s301, %s302
      %s304 = smul.addr %s303, 8
      %s305 = scalar_lea.vmem %s3, %s304
      // Predicated region
      $region29: #{clfcrn_decoder_forward.17} parent=27 // pred_check
        %p306 = pneg %p96
      $region30: #{clfcrn_decoder_forward.17} parent=27 // pred_check_branch
        %308 = sbr.rel (%p306) target = $region32
      $region31: #{clfcrn_decoder_forward.17} parent=27 // pred_region
        _
      $region32: #{clfcrn_decoder_forward.17} parent=27 // pred_fallthru
        _
      // Predicated region
      $region33: #{clfcrn_decoder_forward.17} parent=27 // pred_check
        %p309 = pneg %p124
      $region34: #{clfcrn_decoder_forward.17} parent=27 // pred_check_branch
        %311 = sbr.rel (%p309) target = $region36
      $region35: #{clfcrn_decoder_forward.17} parent=27 // pred_region
        _
      $region36: #{clfcrn_decoder_forward.17} parent=27 // pred_fallthru
        _
    $region28: #{clfcrn_decoder_forward.17} parent=5 // pred_fallthru
      _
    %p312 = scmp.le.s32.totalorder 2, %s10
    // Predicated region
    $region37: #{clfcrn_decoder_forward.17} parent=5 // pred_check
      %p313 = pneg %p312
    $region38: #{clfcrn_decoder_forward.17} parent=5 // pred_check_branch
      %315 = sbr.rel (%p313) target = $region40
    $region39: #{clfcrn_decoder_forward.17} parent=5 // pred_region
      %s316 = ssub.s32 %s10, 2
      // Predicated region
      $region41: #{clfcrn_decoder_forward.17} parent=39 // pred_check
        %p317 = pneg %p102
      $region42: #{clfcrn_decoder_forward.17} parent=39 // pred_check_branch
        %319 = sbr.rel (%p317) target = $region44
      $region43: #{clfcrn_decoder_forward.17} parent=39 // pred_region
        %p320 = scmp.lt.s32.totalorder %s21, 1
        %s321 = scalar_select %p320, %s21, 1
        %p322 = scmp.lt.s32.totalorder %s22, 0
        %s323 = scalar_select %p322, %s22, 0
        %s324 = smul.addr %s321, 2
        %s325 = sadd.s32 %s323, %s324
        %s326 = smul.addr %s325, 8
        %s327 = scalar_lea.vmem %s2, %s326
      $region44: #{clfcrn_decoder_forward.17} parent=39 // pred_fallthru
        _
      // Predicated region
      $region45: #{clfcrn_decoder_forward.17} parent=39 // pred_check
        %p328 = pneg %p130
      $region46: #{clfcrn_decoder_forward.17} parent=39 // pred_check_branch
        %330 = sbr.rel (%p328) target = $region48
      $region47: #{clfcrn_decoder_forward.17} parent=39 // pred_region
        %p331 = scmp.lt.s32.totalorder %s21, 1
        %s332 = scalar_select %p331, %s21, 1
        %p333 = scmp.lt.s32.totalorder %s22, 0
        %s334 = scalar_select %p333, %s22, 0
        %s335 = smul.addr %s334, 2
        %s336 = smul.addr %s332, 2
        %s337 = sadd.s32 %s335, %s336
        %s338 = smul.addr %s337, 8
        %s339 = scalar_lea.vmem %s3, %s338
      $region48: #{clfcrn_decoder_forward.17} parent=39 // pred_fallthru
        _
    $region40: #{clfcrn_decoder_forward.17} parent=5 // pred_fallthru
      _
  $region6: #{clfcrn_decoder_forward.17} parent=0 // loop_footer
    %s14 = sadd.s32 1, %s10
  $region7: #{clfcrn_decoder_forward.17} parent=0 // loop_footer_branch
    %9 = sbr.rel target = $region3
  $region8: #{clfcrn_decoder_forward.17} parent=0 // loop_exit
    _

// kernel: clfcrn_decoder_forward.29
$region0: #{clfcrn_decoder_forward.29}
  #allocation0 [shape = 'u32[]', space=smem, size = 0x4, offset = 0x4, fixed_abs, tag = 'smem constant byte address 0x4 - core index']
  #allocation1 [shape = 'u32[72,128]{1,0:T(1,128)}', space=vmem, size = 0x9000, scoped, tag = 'internal scratch']
  %s0 = inlined_call_operand.vmem [shape: f32[2,48,128], index: 0, kind: input, shape index: {}]
  %s1 = inlined_call_operand.vmem [shape: f32[4,48], index: 1, kind: input, shape index: {}]
  %s2 = inlined_call_operand.vmem [shape: f32[4,1], index: 2, kind: input, shape index: {}]
  %s3 = inlined_call_operand.hbm [shape: f32[2,4,128], index: 3, kind: output, shape index: {}]
  %s4 = sld [smem:[#allocation0]]
  $region45: #{clfcrn_decoder_forward.29} parent=0
    _
  %s6 = ssub.s32 1, %s4
  %s7 = scalar_select 0, %s6, %s4
  $region1: #{clfcrn_decoder_forward.29} parent=0
    #allocation2 [shape = 'u8[4096]{0}', space=vmem, size = 0x1000, scoped, tag = 'output window, operand 0']
    #allocation3 [shape = 's32[2]{0}', space=sflag, size = 0x8, scoped, tag = 'scoped memory for clfcrn_decoder_forward.29']
    %8 = vsyncpa [#allocation3], 0
    %s9 = scalar_lea.sflag [#allocation3], 1
    %10 = vsyncpa %s9, 0
    loop: start=0, step=1, limit=4
    $region2: #{clfcrn_decoder_forward.29} parent=1 // loop_pre_header
      _
    $region3: #{clfcrn_decoder_forward.29} parent=1 // loop_header
      %s12 = sphi 0, %s16
      %p13 = scmp.ge.s32.totalorder %s12, 4
      %s19 = sphi 0, %s31
      %s20 = sphi 0, %s27
      %s21 = sphi 0, %s19
      %s22 = sphi 0, %s20
      %s23 = sphi 0, %s21
      %s24 = sphi 0, %s22
      %s36 = sphi 0, %s38
      %s39 = sphi 0, %s36
      %s40 = sphi 0, %s39
      %s56 = sphi 0, %s40
      %s60 = sphi 0, %s60
      %s62 = sphi 0, %s60
      %s63 = sphi 0, %s62
      %s77 = sphi 0, %s63
      %s81 = sphi 0, %s81
      %s83 = sphi 0, %s81
      %s84 = sphi 0, %s83
      %s98 = sphi 0, %s84
      %s106 = sphi 0, %s108
      %s109 = sphi 0, %s106
      %s110 = sphi 0, %s109
      %s126 = sphi 0, %s110
    $region4: #{clfcrn_decoder_forward.29} parent=1 // loop_header_branch
      %15 = sbr.rel (%p13) target = $region8
    $region5: #{clfcrn_decoder_forward.29} parent=1 // loop_body
      %s17 = ssub.s32 %s12, 1
      %s18 = ssub.s32 %s12, 2
      %s25 = sadd.s32 1, %s20
      %p26 = scmp.ge.s32.totalorder %s25, 1
      %s27 = scalar_select %p26, 0, %s25
      %s28 = sadd.s32 1, %s19
      %s29 = scalar_select %p26, %s28, %s19
      %p30 = scmp.ge.s32.totalorder %s29, 2
      %s31 = scalar_select %p30, 0, %s29
      %s32 = ssub.s32 %s19, %s31
      %s33 = ssub.s32 %s20, %s27
      %s34 = sor.u32 %s32, %s33
      %p35 = scmp.eq.s32.totalorder %s34, 0
      %s37 = sadd.s32 %s36, 1
      %s38 = scalar_select %p35, %s36, %s37
      %p41 = pneg %p35
      %p42 = scmp.eq.s32.totalorder %s12, 1
      %p43 = por %p41, %p42
      %p44 = scmp.ne.s32.totalorder %s36, %s39
      %p45 = scmp.eq.s32.totalorder %s12, 0
      %p46 = por %p44, %p45
      %p47 = scmp.ne.s32.totalorder %s36, %s39
      %p48 = scmp.eq.s32.totalorder %s17, 1
      %p49 = por %p47, %p48
      %p50 = scmp.ne.s32.totalorder %s39, %s40
      %p51 = scmp.eq.s32.totalorder %s17, 0
      %p52 = por %p50, %p51
      %p53 = scmp.ne.s32.totalorder %s39, %s40
      %p54 = scmp.eq.s32.totalorder %s18, 1
      %p55 = por %p53, %p54
      %p57 = scmp.ne.s32.totalorder %s40, %s56
      %p58 = scmp.eq.s32.totalorder %s18, 0
      %p59 = por %p57, %p58
      %s61 = sadd.s32 %s60, 1
      %p64 = scmp.eq.s32.totalorder %s12, 1
      %p65 = scmp.ne.s32.totalorder %s60, %s62
      %p66 = scmp.eq.s32.totalorder %s12, 0
      %p67 = por %p65, %p66
      %p68 = scmp.ne.s32.totalorder %s60, %s62
      %p69 = scmp.eq.s32.totalorder %s17, 1
      %p70 = por %p68, %p69
      %p71 = scmp.ne.s32.totalorder %s62, %s63
      %p72 = scmp.eq.s32.totalorder %s17, 0
      %p73 = por %p71, %p72
      %p74 = scmp.ne.s32.totalorder %s62, %s63
      %p75 = scmp.eq.s32.totalorder %s18, 1
      %p76 = por %p74, %p75
      %p78 = scmp.ne.s32.totalorder %s63, %s77
      %p79 = scmp.eq.s32.totalorder %s18, 0
      %p80 = por %p78, %p79
      %s82 = sadd.s32 %s81, 1
      %p85 = scmp.eq.s32.totalorder %s12, 1
      %p86 = scmp.ne.s32.totalorder %s81, %s83
      %p87 = scmp.eq.s32.totalorder %s12, 0
      %p88 = por %p86, %p87
      %p89 = scmp.ne.s32.totalorder %s81, %s83
      %p90 = scmp.eq.s32.totalorder %s17, 1
      %p91 = por %p89, %p90
      %p92 = scmp.ne.s32.totalorder %s83, %s84
      %p93 = scmp.eq.s32.totalorder %s17, 0
      %p94 = por %p92, %p93
      %p95 = scmp.ne.s32.totalorder %s83, %s84
      %p96 = scmp.eq.s32.totalorder %s18, 1
      %p97 = por %p95, %p96
      %p99 = scmp.ne.s32.totalorder %s84, %s98
      %p100 = scmp.eq.s32.totalorder %s18, 0
      %p101 = por %p99, %p100
      %s102 = ssub.s32 %s19, %s31
      %s103 = ssub.s32 %s20, %s27
      %s104 = sor.u32 %s102, %s103
      %p105 = scmp.eq.s32.totalorder %s104, 0
      %s107 = sadd.s32 %s106, 1
      %s108 = scalar_select %p105, %s106, %s107
      %p111 = pneg %p105
      %p112 = scmp.eq.s32.totalorder %s12, 1
      %p113 = por %p111, %p112
      %p114 = scmp.ne.s32.totalorder %s106, %s109
      %p115 = scmp.eq.s32.totalorder %s12, 0
      %p116 = por %p114, %p115
      %p117 = scmp.ne.s32.totalorder %s106, %s109
      %p118 = scmp.eq.s32.totalorder %s17, 1
      %p119 = por %p117, %p118
      %p120 = scmp.ne.s32.totalorder %s109, %s110
      %p121 = scmp.eq.s32.totalorder %s17, 0
      %p122 = por %p120, %p121
      %p123 = scmp.ne.s32.totalorder %s109, %s110
      %p124 = scmp.eq.s32.totalorder %s18, 1
      %p125 = por %p123, %p124
      %p127 = scmp.ne.s32.totalorder %s110, %s126
      %p128 = scmp.eq.s32.totalorder %s18, 0
      %p129 = por %p127, %p128
      %p130 = scmp.le.s32.totalorder 1, %s12
      %p131 = scmp.lt.s32.totalorder %s12, 3
      %p132 = pnand %p130, %p131
      %p133 = pneg %p132
      // Predicated region
      $region9: #{clfcrn_decoder_forward.29} parent=5 // pred_check
        _
      $region10: #{clfcrn_decoder_forward.29} parent=5 // pred_check_branch
        %135 = sbr.rel (%p132) target = $region12
      $region11: #{clfcrn_decoder_forward.29} parent=5 // pred_region
        %s136 = ssub.s32 %s12, 1
        // Predicated region
        $region13: #{clfcrn_decoder_forward.29} parent=11 // pred_check
          %p137 = pneg %p73
        $region14: #{clfcrn_decoder_forward.29} parent=11 // pred_check_branch
          %139 = sbr.rel (%p137) target = $region16
        $region15: #{clfcrn_decoder_forward.29} parent=11 // pred_region
          _
        $region16: #{clfcrn_decoder_forward.29} parent=11 // pred_fallthru
          _
        // Predicated region
        $region17: #{clfcrn_decoder_forward.29} parent=11 // pred_check
          %p140 = pneg %p94
        $region18: #{clfcrn_decoder_forward.29} parent=11 // pred_check_branch
          %142 = sbr.rel (%p140) target = $region20
        $region19: #{clfcrn_decoder_forward.29} parent=11 // pred_region
          _
        $region20: #{clfcrn_decoder_forward.29} parent=11 // pred_fallthru
          _
      $region12: #{clfcrn_decoder_forward.29} parent=5 // pred_fallthru
        _
      %p143 = scmp.lt.s32.totalorder %s12, 2
      // Predicated region
      $region21: #{clfcrn_decoder_forward.29} parent=5 // pred_check
        %p144 = pneg %p143
      $region22: #{clfcrn_decoder_forward.29} parent=5 // pred_check_branch
        %146 = sbr.rel (%p144) target = $region24
      $region23: #{clfcrn_decoder_forward.29} parent=5 // pred_region
        // Predicated region
        $region25: #{clfcrn_decoder_forward.29} parent=23 // pred_check
          %p147 = pneg %p46
        $region26: #{clfcrn_decoder_forward.29} parent=23 // pred_check_branch
          %149 = sbr.rel (%p147) target = $region28
        $region27: #{clfcrn_decoder_forward.29} parent=23 // pred_region
          %p150 = scmp.lt.s32.totalorder %s19, 1
          %s151 = scalar_select %p150, %s19, 1
          %p152 = scmp.lt.s32.totalorder %s20, 0
          %s153 = scalar_select %p152, %s20, 0
          %s154 = smul.addr %s151, 6
          %s155 = sadd.s32 %s153, %s154
          %s156 = smul.addr %s155, 8
          %s157 = scalar_lea.vmem %s0, %s156
        $region28: #{clfcrn_decoder_forward.29} parent=23 // pred_fallthru
          _
      $region24: #{clfcrn_decoder_forward.29} parent=5 // pred_fallthru
        _
      %p158 = scmp.le.s32.totalorder 1, %s12
      %p159 = scmp.lt.s32.totalorder %s12, 3
      %p160 = pnand %p158, %p159
      %p161 = pneg %p160
      // Predicated region
      $region29: #{clfcrn_decoder_forward.29} parent=5 // pred_check
        _
      $region30: #{clfcrn_decoder_forward.29} parent=5 // pred_check_branch
        %163 = sbr.rel (%p160) target = $region32
      $region31: #{clfcrn_decoder_forward.29} parent=5 // pred_region
        %s164 = ssub.s32 %s12, 1
        %p165 = scmp.lt.s32.totalorder %s21, 1
        %s166 = scalar_select %p165, %s21, 1
        %p167 = scmp.lt.s32.totalorder %s22, 0
        %s168 = scalar_select %p167, %s22, 0
        %s169 = smul.addr %s166, 6
        %s170 = sadd.s32 %s168, %s169
        %s171 = smul.addr %s170, 8
        %s172 = scalar_lea.vmem %s0, %s171
        %p173 = pneg %p52
        %p174 = pneg %p49
        %p175 = pneg %p73
        %p176 = pneg %p70
        %p177 = pneg %p94
        %p178 = pneg %p91
        %p179 = pneg %p122
        %p180 = pneg %p119
        %s181 = sand.u32 %s109, 1
        %s182 = scalar_lea.sflag [#allocation3], %s181
        %s183 = sand.u32 %s109, 1
        %s184 = smul.addr %s183, 4
        %s185 = scalar_lea.vmem [#allocation2], %s184
        %p186 = scmp.lt.s32.totalorder %s21, 1
        %s187 = scalar_select %p186, %s21, 1
        %p188 = scmp.lt.s32.totalorder %s22, 0
        %s189 = scalar_select %p188, %s22, 0
        %s190 = smul.addr %s187, 6
        %s191 = sadd.s32 %s189, %s190
        %s192 = smul.addr %s191, 8
        %s193 = scalar_lea.vmem %s0, %s192
        %v194 = vld [vmem:[%s1] sm:$0xf]
        %v195 = vld [vmem:[%s193] sm:$0xff]
        %v196 = vld [vmem:[%s193 + $0x8] sm:$0xff]
        %v197 = vld [vmem:[%s193 + $0x10] sm:$0xff]
        %v198 = vld [vmem:[%s193 + $0x18] sm:$0xff]
        %v199 = vld [vmem:[%s193 + $0x20] sm:$0xff]
        %v200 = vld [vmem:[%s193 + $0x28] sm:$0xff]
        %v201 = vld [vmem:[%s2] sm:$0xf]
        %203 = vset.pattern.permute.xlu0 0
        %204 = vperm.xlu0 %203, %v201
        %v205 = vpop.permute.xlu0 %204
        %vm207 = vcmask 392192
        %v209 = vsel %vm207, %v194, 0
        %211 = vmatpush.msra.mxu0 0.0
        %212 = vmatpush.msra.mxu0 0.0
        %213 = vmatpush.msra.mxu0 0.0
        %214 = vmatpush.msra.mxu0 0.0
        %215 = vmatpush.msra.mxu0 0.0
        %216 = vmatpush.msra.mxu0 0.0
        %217 = vmatpush.msra.mxu0 0.0
        %218 = vmatpush.msra.mxu0 0.0
        %219 = vmatpush.msra.mxu0 0.0
        %220 = vmatpush.msra.mxu0 0.0
        %221 = vmatpush.msra.mxu0 %v200
        %222 = vmatpush.msra.mxu0 %v199
        %223 = vmatpush.msra.mxu0 %v198
        %224 = vmatpush.msra.mxu0 %v197
        %225 = vmatpush.msra.mxu0 %v196
        %226 = vmatpush.msra.mxu0 %v195
        %227 = vmatmul.f32.gmra.mxu0 %v209
        %v228 = vpop.f32.mrf.mxu0
        %v229 = vadd.f32 %v205, %v228
        %230 = vdwg.mxu0
        %v231 = vmax.f32 %v229, 0.0
        %s232 = smul.u32 %s22, 128
        %v233 = vlaneseq
        %v234 = vand.u32 %v233, 127
        %v235 = vstv %s232
        %v236 = vadd.s32 %v235, %v234
        %vm237 = vcmp.lt.s32.totalorder %v236, 16
        %v238 = vsel %vm237, %v231, 0.0
        %239 = vst [vmem:[%s185] sm:$0xf] %v238
        %s240 = sand.u32 %s109, 1
        %s241 = scalar_lea.sflag [#allocation3], %s240
        %s242 = sand.u32 %s109, 1
        %s243 = smul.addr %s242, 4
        %s244 = scalar_lea.vmem [#allocation2], %s243
        // Predicated region
        $region33: #{clfcrn_decoder_forward.29} parent=31 // pred_check
          %p245 = pneg %p119
        $region34: #{clfcrn_decoder_forward.29} parent=31 // pred_check_branch
          %247 = sbr.rel (%p245) target = $region36
        $region35: #{clfcrn_decoder_forward.29} parent=31 // pred_region
          %249 = vsyncadd %s241, 0
          %s250 = sadd.s32 %s22, %s21
          %s251 = smul.addr %s250, 4
          %s252 = scalar_lea.hbm %s3, %s251
          %s254 = sshll.u32 %s244, 4
          %s255 = int_to_ptr.vmem [resolvable:$true] %s254
          %s256 = sshll.u32 %s252, 4
          %s257 = int_to_ptr.hbm [resolvable:$true] %s256
          %259 = dma.vmem_to_hbm [thread:$0]  %s255, 64, %s257, %s241
        $region36: #{clfcrn_decoder_forward.29} parent=31 // pred_fallthru
          _
      $region32: #{clfcrn_decoder_forward.29} parent=5 // pred_fallthru
        _
      %p260 = scmp.le.s32.totalorder 2, %s12
      // Predicated region
      $region37: #{clfcrn_decoder_forward.29} parent=5 // pred_check
        %p261 = pneg %p260
      $region38: #{clfcrn_decoder_forward.29} parent=5 // pred_check_branch
        %263 = sbr.rel (%p261) target = $region40
      $region39: #{clfcrn_decoder_forward.29} parent=5 // pred_region
        %s264 = ssub.s32 %s12, 2
        // Predicated region
        $region41: #{clfcrn_decoder_forward.29} parent=39 // pred_check
          %p265 = pneg %p125
        $region42: #{clfcrn_decoder_forward.29} parent=39 // pred_check_branch
          %267 = sbr.rel (%p265) target = $region44
        $region43: #{clfcrn_decoder_forward.29} parent=39 // pred_region
          %s268 = sand.u32 %s110, 1
          %s269 = scalar_lea.sflag [#allocation3], %s268
          %s270 = sand.u32 %s110, 1
          %s271 = smul.addr %s270, 4
          %s272 = scalar_lea.vmem [#allocation2], %s271
          %274 = dma.done %s269, 64
        $region44: #{clfcrn_decoder_forward.29} parent=39 // pred_fallthru
          _
      $region40: #{clfcrn_decoder_forward.29} parent=5 // pred_fallthru
        _
    $region6: #{clfcrn_decoder_forward.29} parent=1 // loop_footer
      %s16 = sadd.s32 1, %s12
    $region7: #{clfcrn_decoder_forward.29} parent=1 // loop_footer_branch
      %11 = sbr.rel target = $region3
    $region8: #{clfcrn_decoder_forward.29} parent=1 // loop_exit
      _
    %275 = vsyncpa [#allocation3], 1
    %s276 = scalar_lea.sflag [#allocation3], 1
    %277 = vsyncpa %s276, 1

</llo_original>
